<compile_context>
chip_gen: v6e
topology: v6e:2x2x1
jax: 0.10.0
libtpu: 0.0.40
codegen_flags: <defaults>
</compile_context>

<pallas_src>
import jax
import jax.numpy as jnp
import numpy as np
from jax.experimental import pallas as pl
from jax.experimental.pallas import tpu as pltpu


_TAPS = tuple((dh, dw) for dh in (-1, 0, 1) for dw in (-1, 0, 1))  # tap 4 = center


# ----------------------------------------------------------------------------
# Host-side helpers
# ----------------------------------------------------------------------------
def _border_masks(H, W):
    """(8, H*W) f32 masks (one per non-center tap) zeroing out-of-image taps."""
    HW = H * W
    pos = np.arange(HW)
    row = pos // W
    col = pos % W
    ms = []
    for dh, dw in _TAPS:
        if dh == 0 and dw == 0:
            continue
        m = np.ones(HW, np.float32)
        if dh < 0:
            m = m * (row >= -dh)
        if dh > 0:
            m = m * (row < H - dh)
        if dw < 0:
            m = m * (col >= -dw)
        if dw > 0:
            m = m * (col < W - dw)
        ms.append(m.astype(np.float32))
    return jnp.asarray(np.stack(ms, 0))


def _plan_tiling(N, C, HW, budget_bytes=4 << 20):
    """Pick (n_pad, b_tile): b_tile % 8 == 0 or b_tile == n_pad, block bounded,
    preferring an even grid length >= 2 so both v7x TensorCores get work."""
    def cands(n):
        return [d for d in range(1, n + 1)
                if n % d == 0 and (d % 8 == 0 or d == n)]

    def fits(d):
        return C * d * HW * 4 <= budget_bytes

    n_pad = N
    ok = [d for d in cands(N) if fits(d)]
    if not ok:
        # Pad batch to a multiple of 8 so a bounded tile always exists.
        n_pad = ((N + 7) // 8) * 8
        ok = [d for d in cands(n_pad) if fits(d)] or [8]

    def pref(d):
        g = n_pad // d
        return (g % 2 == 0 and g >= 2, d)   # even grid >= 2 first, then biggest tile

    return n_pad, max(ok, key=pref)


# ----------------------------------------------------------------------------
# Pallas kernel
# ----------------------------------------------------------------------------
def _make_inv_block_kernel(H, W, C, split1, b_tile, clamp):
    HW = H * W
    split2 = C - split1

    # Static tap table: (lane-roll amount, mask row or None for center tap).
    tap_info = []
    mi = 0
    for dh, dw in _TAPS:
        if dh == 0 and dw == 0:
            tap_info.append((0, None))
        else:
            # shifted[p] == x[p + dh*W + dw]  (jnp.roll convention)
            tap_info.append(((-(dh * W + dw)) % HW, mi))
            mi += 1

    def kernel(x_ref, masks_ref, winv_ref, wF_ref, bF_ref,
               wG_ref, bG_ref, wH_ref, bH_ref, out_ref):
        # Hoisted (1, HW) mask rows (resident VMEM block, loaded once per step).
        msk = [masks_ref[k:k + 1, :] for k in range(8)]

        # Channel slabs: each (b_tile, HW), dense on sublanes and lanes.
        x = [x_ref[ci] for ci in range(C)]

        # Invertible 1x1 conv: z[o] = sum_i W[o,i] * x[i]  (VPU scalar FMAs).
        z = []
        for o in range(C):
            acc = winv_ref[o * C] * x[0]
            for i in range(1, C):
                acc = acc + winv_ref[o * C + i] * x[i]
            z.append(acc)
        x1, x2 = z[:split1], z[split1:]

        def shifted_sources(slabs, cin):
            # Yields (tap, ci, rolled+masked (b_tile, HW) slab) — built ONCE per use.
            for t, (shift, m) in enumerate(tap_info):
                for ci in range(cin):
                    src = slabs[ci]
                    if shift:
                        src = pltpu.roll(src, shift, 1)     # XLU lane rotate
                    if m is not None:
                        src = src * msk[m]                  # zero-pad borders
                    yield t, ci, src

        # Flat weight layout: w[(tap*cin + ci)*cout + co], tap = (dh+1)*3+(dw+1).
        def conv3x3(slabs, w_ref, b_ref, cin, cout):
            outs = [jnp.full((b_tile, HW), b_ref[co], jnp.float32)
                    for co in range(cout)]
            for t, ci, src in shifted_sources(slabs, cin):
                base = (t * cin + ci) * cout
                for co in range(cout):
                    outs[co] = outs[co] + w_ref[base + co] * src
            return outs

        def conv3x3_dual(slabs, wa_ref, ba_ref, wb_ref, bb_ref, cin, ca, cb):
            # H and G both consume y1: share each rolled+masked source slab.
            outa = [jnp.full((b_tile, HW), ba_ref[co], jnp.float32)
                    for co in range(ca)]
            outb = [jnp.full((b_tile, HW), bb_ref[co], jnp.float32)
                    for co in range(cb)]
            for t, ci, src in shifted_sources(slabs, cin):
                basea = (t * cin + ci) * ca
                baseb = (t * cin + ci) * cb
                for co in range(ca):
                    outa[co] = outa[co] + wa_ref[basea + co] * src
                for co in range(cb):
                    outb[co] = outb[co] + wb_ref[baseb + co] * src
            return outa, outb

        # y1 = x1 + F(x2)
        f = conv3x3(x2, wF_ref, bF_ref, split2, split1)
        y1 = [x1[i] + f[i] for i in range(split1)]

        # Fused H & G over y1.  wH/bH were pre-scaled by 0.5 in the wrapper, so
        #   clamp * (sigmoid(H(y1)) * 2 - 1) == clamp * tanh(h).
        h, g = conv3x3_dual(y1, wH_ref, bH_ref, wG_ref, bG_ref,
                            split1, split2, split2)

        # y2 = x2 * exp(s) + G(y1)
        y2 = [x2[i] * jnp.exp(clamp * jnp.tanh(h[i])) + g[i]
              for i in range(split2)]

        # Dense multi-sublane slab stores, straight into the channel rows.
        for i in range(split1):
            out_ref[i] = y1[i]
        for i in range(split2):
            out_ref[split1 + i] = y2[i]

    return kernel


# ----------------------------------------------------------------------------
# Wrapper (layout plumbing + pallas_call)
# ----------------------------------------------------------------------------
def inv_block_forward(x_nchw, params, clamp=0.8):
    N, C, H, W = map(int, x_nchw.shape)
    split1 = int(params["split1"])
    HW = H * W

    # Layout plumbing: (N, C, H, W) -> (C, N, H*W)  (channel-major slabs).
    x3d = jnp.transpose(jnp.reshape(x_nchw.astype(jnp.float32), (N, C, HW)),
                        (1, 0, 2))

    def flat_conv_w(w, scale=1.0):   # torch (cout, cin, 3, 3) -> flat [tap, ci, co]
        w = jnp.asarray(w, jnp.float32) * scale
        return jnp.reshape(jnp.transpose(w, (2, 3, 1, 0)), (-1,))

    winv = jnp.reshape(jnp.asarray(params["w_inv"], jnp.float32), (-1,))
    wF = flat_conv_w(params["wF"])
    bF = jnp.asarray(params["bF"], jnp.float32)
    wG = flat_conv_w(params["wG"])
    bG = jnp.asarray(params["bG"], jnp.float32)
    # Fold the 0.5 of  sigmoid(h)*2-1 == tanh(h/2)  into the H subnet.
    wH = flat_conv_w(params["wH"], 0.5)
    bH = 0.5 * jnp.asarray(params["bH"], jnp.float32)

    masks = _border_masks(H, W)                       # (8, HW), resident in VMEM

    n_pad, b_tile = _plan_tiling(N, C, HW)
    if n_pad != N:
        x3d = jnp.concatenate(
            [x3d, jnp.zeros((C, n_pad - N, HW), x3d.dtype)], axis=1)
    grid = (n_pad // b_tile,)

    kernel = _make_inv_block_kernel(H, W, C, split1, b_tile, float(clamp))

    # VMEM budget: 2x double-buffered input + output blocks + masks + headroom.
    block_bytes = C * b_tile * HW * 4
    vmem_needed = 4 * block_bytes + 8 * HW * 4 + (2 << 20)
    vmem_limit = int(min(vmem_needed, 60 << 20)) if vmem_needed > (32 << 20) else None

    def smem_spec():
        return pl.BlockSpec(memory_space=pltpu.MemorySpace.SMEM)

    out3d = pl.pallas_call(
        kernel,
        out_shape=jax.ShapeDtypeStruct((C, n_pad, HW), jnp.float32),
        grid=grid,
        in_specs=[
            pl.BlockSpec((C, b_tile, HW), lambda i: (0, i, 0)),   # x slabs
            pl.BlockSpec((8, HW), lambda i: (0, 0)),              # border masks (resident)
            smem_spec(),                                          # w_inv (flat)
            smem_spec(), smem_spec(),                             # wF, bF
            smem_spec(), smem_spec(),                             # wG, bG
            smem_spec(), smem_spec(),                             # wH, bH (pre-scaled 0.5)
        ],
        out_specs=pl.BlockSpec((C, b_tile, HW), lambda i: (0, i, 0)),
        compiler_params=pltpu.CompilerParams(
            dimension_semantics=("parallel",),
            vmem_limit_bytes=vmem_limit),
    )(x3d, masks, winv, wF, bF, wG, bG, wH, bH)

    out3d = out3d[:, :N, :]
    return jnp.reshape(jnp.transpose(out3d, (1, 0, 2)), (N, C, H, W))


# ----------------------------------------------------------------------------
# Deterministic parameter init (shapes as in InvBlock.__init__)
# ----------------------------------------------------------------------------
def init_params(key, channel_num, channel_split_num):
    split1 = channel_split_num
    split2 = channel_num - channel_split_num
    ks = jax.random.split(key, 7)

    # InvertibleConv1x1: orthogonal init (LU re-composition equals it at init).
    w0 = np.asarray(jax.random.normal(ks[0], (channel_num, channel_num), jnp.float32))
    q, _ = np.linalg.qr(w0)
    w_inv = jnp.asarray(q, jnp.float32)

    def conv_init(kw, kb, cout, cin):
        w = 0.1 * jax.random.normal(kw, (cout, cin, 3, 3), jnp.float32)
        b = 0.1 * jax.random.normal(kb, (cout,), jnp.float32)
        return w, b

    wF, bF = conv_init(ks[1], ks[2], split1, split2)   # F: split2 -> split1
    wG, bG = conv_init(ks[3], ks[4], split2, split1)   # G: split1 -> split2
    wH, bH = conv_init(ks[5], ks[6], split2, split1)   # H: split1 -> split2
    return dict(split1=split1, w_inv=w_inv,
                wF=wF, bF=bF, wG=wG, bG=bG, wH=wH, bH=bH)


# ----------------------------------------------------------------------------
# Pure-JAX reference (same semantics as the PyTorch forward)
# ----------------------------------------------------------------------------
def inv_block_reference(x_nchw, params, clamp=0.8):
    split1 = int(params["split1"])
    hp = jax.lax.Precision.HIGHEST

    z = jnp.einsum("oc,nchw->nohw", params["w_inv"], x_nchw, precision=hp)
    x1, x2 = z[:, :split1], z[:, split1:]

    def conv(t, w, b):
        y = jax.lax.conv_general_dilated(
            t, w, window_strides=(1, 1), padding="SAME",
            dimension_numbers=("NCHW", "OIHW", "NCHW"), precision=hp)
        return y + b[None, :, None, None]

    def sigmoid(v):
        return 1.0 / (1.0 + jnp.exp(-v))

    y1 = x1 + conv(x2, params["wF"], params["bF"])
    s = clamp * (sigmoid(conv(y1, params["wH"], params["bH"])) * 2.0 - 1.0)
    y2 = x2 * jnp.exp(s) + conv(y1, params["wG"], params["bG"])
    return jnp.concatenate([y1, y2], axis=1)


if __name__ == "__main__":
    key = jax.random.PRNGKey(0)
    k_x, k_p = jax.random.split(key)

    # N=16 -> b_tile=8 (fully dense 8-sublane slabs), grid=(2,) so both v7x
    # TensorCores get a parallel step; shapes stay small.
    N, C, H, W = 16, 4, 16, 16
    channel_split_num = C // 2

    x = jax.random.normal(k_x, (N, C, H, W), jnp.float32)
    params = init_params(k_p, C, channel_split_num)

    out = inv_block_forward(x, params)
    out = jax.block_until_ready(out)

    ref = inv_block_reference(x, params)
    # All-f32 path: tight tolerance (only transcendental / accumulation-order
    # differences remain; any indexing/semantic error would be O(0.1+)).
    np.testing.assert_allclose(np.asarray(out), np.asarray(ref),
                               rtol=1e-4, atol=1e-5)
    assert np.isfinite(np.asarray(out)).all()
    print("KERNEL_OK")
</pallas_src>

<mosaic_0001>
module attributes {stable_mosaic.version = 11 : i64} {
  func.func @kernel(%arg0: i32, %arg1: memref<4x8x256xf32, #tpu.memory_space<vmem>>, %arg2: memref<8x256xf32, #tpu.memory_space<vmem>>, %arg3: memref<16xf32, #tpu.memory_space<smem>>, %arg4: memref<36xf32, #tpu.memory_space<smem>>, %arg5: memref<2xf32, #tpu.memory_space<smem>>, %arg6: memref<36xf32, #tpu.memory_space<smem>>, %arg7: memref<2xf32, #tpu.memory_space<smem>>, %arg8: memref<36xf32, #tpu.memory_space<smem>>, %arg9: memref<2xf32, #tpu.memory_space<smem>>, %arg10: memref<4x8x256xf32, #tpu.memory_space<vmem>>) attributes {dimension_semantics = [#tpu.dimension_semantics<parallel>], iteration_bounds = array<i64: 2>, scalar_prefetch = 0 : i64, scratch_operands = 0 : i64, tpu.core_type = #tpu.core_type<tc>, window_params = [{transform_indices = @transform_0, window_bounds = array<i64: 4, 8, 256>}, {pipeline_mode = #tpu.pipeline_mode<synchronous>, transform_indices = @transform_1, window_bounds = array<i64: 8, 256>}, {transform_indices = @transform_2, window_bounds = array<i64: 16>}, {transform_indices = @transform_3, window_bounds = array<i64: 36>}, {transform_indices = @transform_4, window_bounds = array<i64: 2>}, {transform_indices = @transform_5, window_bounds = array<i64: 36>}, {transform_indices = @transform_6, window_bounds = array<i64: 2>}, {transform_indices = @transform_7, window_bounds = array<i64: 36>}, {transform_indices = @transform_8, window_bounds = array<i64: 2>}, {transform_indices = @transform_9, window_bounds = array<i64: 4, 8, 256>}]} {
    %c0 = arith.constant 0 : index
    %c0_0 = arith.constant 0 : index
    %0 = vector.load %arg2[%c0, %c0_0] : memref<8x256xf32, #tpu.memory_space<vmem>>, vector<1x256xf32>
    %c1 = arith.constant 1 : index
    %c0_1 = arith.constant 0 : index
    %1 = vector.load %arg2[%c1, %c0_1] : memref<8x256xf32, #tpu.memory_space<vmem>>, vector<1x256xf32>
    %c2 = arith.constant 2 : index
    %c0_2 = arith.constant 0 : index
    %2 = vector.load %arg2[%c2, %c0_2] : memref<8x256xf32, #tpu.memory_space<vmem>>, vector<1x256xf32>
    %c3 = arith.constant 3 : index
    %c0_3 = arith.constant 0 : index
    %3 = vector.load %arg2[%c3, %c0_3] : memref<8x256xf32, #tpu.memory_space<vmem>>, vector<1x256xf32>
    %c4 = arith.constant 4 : index
    %c0_4 = arith.constant 0 : index
    %4 = vector.load %arg2[%c4, %c0_4] : memref<8x256xf32, #tpu.memory_space<vmem>>, vector<1x256xf32>
    %c5 = arith.constant 5 : index
    %c0_5 = arith.constant 0 : index
    %5 = vector.load %arg2[%c5, %c0_5] : memref<8x256xf32, #tpu.memory_space<vmem>>, vector<1x256xf32>
    %c6 = arith.constant 6 : index
    %c0_6 = arith.constant 0 : index
    %6 = vector.load %arg2[%c6, %c0_6] : memref<8x256xf32, #tpu.memory_space<vmem>>, vector<1x256xf32>
    %c7 = arith.constant 7 : index
    %c0_7 = arith.constant 0 : index
    %7 = vector.load %arg2[%c7, %c0_7] : memref<8x256xf32, #tpu.memory_space<vmem>>, vector<1x256xf32>
    %c0_8 = arith.constant 0 : index
    %c0_9 = arith.constant 0 : index
    %c0_10 = arith.constant 0 : index
    %8 = vector.load %arg1[%c0_8, %c0_9, %c0_10] : memref<4x8x256xf32, #tpu.memory_space<vmem>>, vector<1x8x256xf32>
    %9 = vector.shape_cast %8 : vector<1x8x256xf32> to vector<8x256xf32>
    %c1_11 = arith.constant 1 : index
    %c0_12 = arith.constant 0 : index
    %c0_13 = arith.constant 0 : index
    %10 = vector.load %arg1[%c1_11, %c0_12, %c0_13] : memref<4x8x256xf32, #tpu.memory_space<vmem>>, vector<1x8x256xf32>
    %11 = vector.shape_cast %10 : vector<1x8x256xf32> to vector<8x256xf32>
    %c2_14 = arith.constant 2 : index
    %c0_15 = arith.constant 0 : index
    %c0_16 = arith.constant 0 : index
    %12 = vector.load %arg1[%c2_14, %c0_15, %c0_16] : memref<4x8x256xf32, #tpu.memory_space<vmem>>, vector<1x8x256xf32>
    %13 = vector.shape_cast %12 : vector<1x8x256xf32> to vector<8x256xf32>
    %c3_17 = arith.constant 3 : index
    %c0_18 = arith.constant 0 : index
    %c0_19 = arith.constant 0 : index
    %14 = vector.load %arg1[%c3_17, %c0_18, %c0_19] : memref<4x8x256xf32, #tpu.memory_space<vmem>>, vector<1x8x256xf32>
    %15 = vector.shape_cast %14 : vector<1x8x256xf32> to vector<8x256xf32>
    %c0_20 = arith.constant 0 : index
    %16 = memref.load %arg3[%c0_20] : memref<16xf32, #tpu.memory_space<smem>>
    %17 = vector.broadcast %16 : f32 to vector<8x256xf32>
    %18 = arith.mulf %17, %9 : vector<8x256xf32>
    %c1_21 = arith.constant 1 : index
    %19 = memref.load %arg3[%c1_21] : memref<16xf32, #tpu.memory_space<smem>>
    %20 = vector.broadcast %19 : f32 to vector<8x256xf32>
    %21 = arith.mulf %20, %11 : vector<8x256xf32>
    %22 = arith.addf %18, %21 : vector<8x256xf32>
    %c2_22 = arith.constant 2 : index
    %23 = memref.load %arg3[%c2_22] : memref<16xf32, #tpu.memory_space<smem>>
    %24 = vector.broadcast %23 : f32 to vector<8x256xf32>
    %25 = arith.mulf %24, %13 : vector<8x256xf32>
    %26 = arith.addf %22, %25 : vector<8x256xf32>
    %c3_23 = arith.constant 3 : index
    %27 = memref.load %arg3[%c3_23] : memref<16xf32, #tpu.memory_space<smem>>
    %28 = vector.broadcast %27 : f32 to vector<8x256xf32>
    %29 = arith.mulf %28, %15 : vector<8x256xf32>
    %30 = arith.addf %26, %29 : vector<8x256xf32>
    %c4_24 = arith.constant 4 : index
    %31 = memref.load %arg3[%c4_24] : memref<16xf32, #tpu.memory_space<smem>>
    %32 = vector.broadcast %31 : f32 to vector<8x256xf32>
    %33 = arith.mulf %32, %9 : vector<8x256xf32>
    %c5_25 = arith.constant 5 : index
    %34 = memref.load %arg3[%c5_25] : memref<16xf32, #tpu.memory_space<smem>>
    %35 = vector.broadcast %34 : f32 to vector<8x256xf32>
    %36 = arith.mulf %35, %11 : vector<8x256xf32>
    %37 = arith.addf %33, %36 : vector<8x256xf32>
    %c6_26 = arith.constant 6 : index
    %38 = memref.load %arg3[%c6_26] : memref<16xf32, #tpu.memory_space<smem>>
    %39 = vector.broadcast %38 : f32 to vector<8x256xf32>
    %40 = arith.mulf %39, %13 : vector<8x256xf32>
    %41 = arith.addf %37, %40 : vector<8x256xf32>
    %c7_27 = arith.constant 7 : index
    %42 = memref.load %arg3[%c7_27] : memref<16xf32, #tpu.memory_space<smem>>
    %43 = vector.broadcast %42 : f32 to vector<8x256xf32>
    %44 = arith.mulf %43, %15 : vector<8x256xf32>
    %45 = arith.addf %41, %44 : vector<8x256xf32>
    %c8 = arith.constant 8 : index
    %46 = memref.load %arg3[%c8] : memref<16xf32, #tpu.memory_space<smem>>
    %47 = vector.broadcast %46 : f32 to vector<8x256xf32>
    %48 = arith.mulf %47, %9 : vector<8x256xf32>
    %c9 = arith.constant 9 : index
    %49 = memref.load %arg3[%c9] : memref<16xf32, #tpu.memory_space<smem>>
    %50 = vector.broadcast %49 : f32 to vector<8x256xf32>
    %51 = arith.mulf %50, %11 : vector<8x256xf32>
    %52 = arith.addf %48, %51 : vector<8x256xf32>
    %c10 = arith.constant 10 : index
    %53 = memref.load %arg3[%c10] : memref<16xf32, #tpu.memory_space<smem>>
    %54 = vector.broadcast %53 : f32 to vector<8x256xf32>
    %55 = arith.mulf %54, %13 : vector<8x256xf32>
    %56 = arith.addf %52, %55 : vector<8x256xf32>
    %c11 = arith.constant 11 : index
    %57 = memref.load %arg3[%c11] : memref<16xf32, #tpu.memory_space<smem>>
    %58 = vector.broadcast %57 : f32 to vector<8x256xf32>
    %59 = arith.mulf %58, %15 : vector<8x256xf32>
    %60 = arith.addf %56, %59 : vector<8x256xf32>
    %c12 = arith.constant 12 : index
    %61 = memref.load %arg3[%c12] : memref<16xf32, #tpu.memory_space<smem>>
    %62 = vector.broadcast %61 : f32 to vector<8x256xf32>
    %63 = arith.mulf %62, %9 : vector<8x256xf32>
    %c13 = arith.constant 13 : index
    %64 = memref.load %arg3[%c13] : memref<16xf32, #tpu.memory_space<smem>>
    %65 = vector.broadcast %64 : f32 to vector<8x256xf32>
    %66 = arith.mulf %65, %11 : vector<8x256xf32>
    %67 = arith.addf %63, %66 : vector<8x256xf32>
    %c14 = arith.constant 14 : index
    %68 = memref.load %arg3[%c14] : memref<16xf32, #tpu.memory_space<smem>>
    %69 = vector.broadcast %68 : f32 to vector<8x256xf32>
    %70 = arith.mulf %69, %13 : vector<8x256xf32>
    %71 = arith.addf %67, %70 : vector<8x256xf32>
    %c15 = arith.constant 15 : index
    %72 = memref.load %arg3[%c15] : memref<16xf32, #tpu.memory_space<smem>>
    %73 = vector.broadcast %72 : f32 to vector<8x256xf32>
    %74 = arith.mulf %73, %15 : vector<8x256xf32>
    %75 = arith.addf %71, %74 : vector<8x256xf32>
    %c0_28 = arith.constant 0 : index
    %76 = memref.load %arg5[%c0_28] : memref<2xf32, #tpu.memory_space<smem>>
    %77 = vector.broadcast %76 : f32 to vector<8x256xf32>
    %c1_29 = arith.constant 1 : index
    %78 = memref.load %arg5[%c1_29] : memref<2xf32, #tpu.memory_space<smem>>
    %79 = vector.broadcast %78 : f32 to vector<8x256xf32>
    %c17_i32 = arith.constant 17 : i32
    %80 = tpu.dynamic_rotate %60 by %c17_i32 dim 1 : vector<8x256xf32>, i32 -> vector<8x256xf32>
    %81 = vector.broadcast %0 : vector<1x256xf32> to vector<8x256xf32>
    %82 = arith.mulf %80, %81 : vector<8x256xf32>
    %c0_30 = arith.constant 0 : index
    %83 = memref.load %arg4[%c0_30] : memref<36xf32, #tpu.memory_space<smem>>
    %84 = vector.broadcast %83 : f32 to vector<8x256xf32>
    %85 = arith.mulf %84, %82 : vector<8x256xf32>
    %86 = arith.addf %77, %85 : vector<8x256xf32>
    %c1_31 = arith.constant 1 : index
    %87 = memref.load %arg4[%c1_31] : memref<36xf32, #tpu.memory_space<smem>>
    %88 = vector.broadcast %87 : f32 to vector<8x256xf32>
    %89 = arith.mulf %88, %82 : vector<8x256xf32>
    %90 = arith.addf %79, %89 : vector<8x256xf32>
    %c17_i32_32 = arith.constant 17 : i32
    %91 = tpu.dynamic_rotate %75 by %c17_i32_32 dim 1 : vector<8x256xf32>, i32 -> vector<8x256xf32>
    %92 = vector.broadcast %0 : vector<1x256xf32> to vector<8x256xf32>
    %93 = arith.mulf %91, %92 : vector<8x256xf32>
    %c2_33 = arith.constant 2 : index
    %94 = memref.load %arg4[%c2_33] : memref<36xf32, #tpu.memory_space<smem>>
    %95 = vector.broadcast %94 : f32 to vector<8x256xf32>
    %96 = arith.mulf %95, %93 : vector<8x256xf32>
    %97 = arith.addf %86, %96 : vector<8x256xf32>
    %c3_34 = arith.constant 3 : index
    %98 = memref.load %arg4[%c3_34] : memref<36xf32, #tpu.memory_space<smem>>
    %99 = vector.broadcast %98 : f32 to vector<8x256xf32>
    %100 = arith.mulf %99, %93 : vector<8x256xf32>
    %101 = arith.addf %90, %100 : vector<8x256xf32>
    %c16_i32 = arith.constant 16 : i32
    %102 = tpu.dynamic_rotate %60 by %c16_i32 dim 1 : vector<8x256xf32>, i32 -> vector<8x256xf32>
    %103 = vector.broadcast %1 : vector<1x256xf32> to vector<8x256xf32>
    %104 = arith.mulf %102, %103 : vector<8x256xf32>
    %c4_35 = arith.constant 4 : index
    %105 = memref.load %arg4[%c4_35] : memref<36xf32, #tpu.memory_space<smem>>
    %106 = vector.broadcast %105 : f32 to vector<8x256xf32>
    %107 = arith.mulf %106, %104 : vector<8x256xf32>
    %108 = arith.addf %97, %107 : vector<8x256xf32>
    %c5_36 = arith.constant 5 : index
    %109 = memref.load %arg4[%c5_36] : memref<36xf32, #tpu.memory_space<smem>>
    %110 = vector.broadcast %109 : f32 to vector<8x256xf32>
    %111 = arith.mulf %110, %104 : vector<8x256xf32>
    %112 = arith.addf %101, %111 : vector<8x256xf32>
    %c16_i32_37 = arith.constant 16 : i32
    %113 = tpu.dynamic_rotate %75 by %c16_i32_37 dim 1 : vector<8x256xf32>, i32 -> vector<8x256xf32>
    %114 = vector.broadcast %1 : vector<1x256xf32> to vector<8x256xf32>
    %115 = arith.mulf %113, %114 : vector<8x256xf32>
    %c6_38 = arith.constant 6 : index
    %116 = memref.load %arg4[%c6_38] : memref<36xf32, #tpu.memory_space<smem>>
    %117 = vector.broadcast %116 : f32 to vector<8x256xf32>
    %118 = arith.mulf %117, %115 : vector<8x256xf32>
    %119 = arith.addf %108, %118 : vector<8x256xf32>
    %c7_39 = arith.constant 7 : index
    %120 = memref.load %arg4[%c7_39] : memref<36xf32, #tpu.memory_space<smem>>
    %121 = vector.broadcast %120 : f32 to vector<8x256xf32>
    %122 = arith.mulf %121, %115 : vector<8x256xf32>
    %123 = arith.addf %112, %122 : vector<8x256xf32>
    %c15_i32 = arith.constant 15 : i32
    %124 = tpu.dynamic_rotate %60 by %c15_i32 dim 1 : vector<8x256xf32>, i32 -> vector<8x256xf32>
    %125 = vector.broadcast %2 : vector<1x256xf32> to vector<8x256xf32>
    %126 = arith.mulf %124, %125 : vector<8x256xf32>
    %c8_40 = arith.constant 8 : index
    %127 = memref.load %arg4[%c8_40] : memref<36xf32, #tpu.memory_space<smem>>
    %128 = vector.broadcast %127 : f32 to vector<8x256xf32>
    %129 = arith.mulf %128, %126 : vector<8x256xf32>
    %130 = arith.addf %119, %129 : vector<8x256xf32>
    %c9_41 = arith.constant 9 : index
    %131 = memref.load %arg4[%c9_41] : memref<36xf32, #tpu.memory_space<smem>>
    %132 = vector.broadcast %131 : f32 to vector<8x256xf32>
    %133 = arith.mulf %132, %126 : vector<8x256xf32>
    %134 = arith.addf %123, %133 : vector<8x256xf32>
    %c15_i32_42 = arith.constant 15 : i32
    %135 = tpu.dynamic_rotate %75 by %c15_i32_42 dim 1 : vector<8x256xf32>, i32 -> vector<8x256xf32>
    %136 = vector.broadcast %2 : vector<1x256xf32> to vector<8x256xf32>
    %137 = arith.mulf %135, %136 : vector<8x256xf32>
    %c10_43 = arith.constant 10 : index
    %138 = memref.load %arg4[%c10_43] : memref<36xf32, #tpu.memory_space<smem>>
    %139 = vector.broadcast %138 : f32 to vector<8x256xf32>
    %140 = arith.mulf %139, %137 : vector<8x256xf32>
    %141 = arith.addf %130, %140 : vector<8x256xf32>
    %c11_44 = arith.constant 11 : index
    %142 = memref.load %arg4[%c11_44] : memref<36xf32, #tpu.memory_space<smem>>
    %143 = vector.broadcast %142 : f32 to vector<8x256xf32>
    %144 = arith.mulf %143, %137 : vector<8x256xf32>
    %145 = arith.addf %134, %144 : vector<8x256xf32>
    %c1_i32 = arith.constant 1 : i32
    %146 = tpu.dynamic_rotate %60 by %c1_i32 dim 1 : vector<8x256xf32>, i32 -> vector<8x256xf32>
    %147 = vector.broadcast %3 : vector<1x256xf32> to vector<8x256xf32>
    %148 = arith.mulf %146, %147 : vector<8x256xf32>
    %c12_45 = arith.constant 12 : index
    %149 = memref.load %arg4[%c12_45] : memref<36xf32, #tpu.memory_space<smem>>
    %150 = vector.broadcast %149 : f32 to vector<8x256xf32>
    %151 = arith.mulf %150, %148 : vector<8x256xf32>
    %152 = arith.addf %141, %151 : vector<8x256xf32>
    %c13_46 = arith.constant 13 : index
    %153 = memref.load %arg4[%c13_46] : memref<36xf32, #tpu.memory_space<smem>>
    %154 = vector.broadcast %153 : f32 to vector<8x256xf32>
    %155 = arith.mulf %154, %148 : vector<8x256xf32>
    %156 = arith.addf %145, %155 : vector<8x256xf32>
    %c1_i32_47 = arith.constant 1 : i32
    %157 = tpu.dynamic_rotate %75 by %c1_i32_47 dim 1 : vector<8x256xf32>, i32 -> vector<8x256xf32>
    %158 = vector.broadcast %3 : vector<1x256xf32> to vector<8x256xf32>
    %159 = arith.mulf %157, %158 : vector<8x256xf32>
    %c14_48 = arith.constant 14 : index
    %160 = memref.load %arg4[%c14_48] : memref<36xf32, #tpu.memory_space<smem>>
    %161 = vector.broadcast %160 : f32 to vector<8x256xf32>
    %162 = arith.mulf %161, %159 : vector<8x256xf32>
    %163 = arith.addf %152, %162 : vector<8x256xf32>
    %c15_49 = arith.constant 15 : index
    %164 = memref.load %arg4[%c15_49] : memref<36xf32, #tpu.memory_space<smem>>
    %165 = vector.broadcast %164 : f32 to vector<8x256xf32>
    %166 = arith.mulf %165, %159 : vector<8x256xf32>
    %167 = arith.addf %156, %166 : vector<8x256xf32>
    %c16 = arith.constant 16 : index
    %168 = memref.load %arg4[%c16] : memref<36xf32, #tpu.memory_space<smem>>
    %169 = vector.broadcast %168 : f32 to vector<8x256xf32>
    %170 = arith.mulf %169, %60 : vector<8x256xf32>
    %171 = arith.addf %163, %170 : vector<8x256xf32>
    %c17 = arith.constant 17 : index
    %172 = memref.load %arg4[%c17] : memref<36xf32, #tpu.memory_space<smem>>
    %173 = vector.broadcast %172 : f32 to vector<8x256xf32>
    %174 = arith.mulf %173, %60 : vector<8x256xf32>
    %175 = arith.addf %167, %174 : vector<8x256xf32>
    %c18 = arith.constant 18 : index
    %176 = memref.load %arg4[%c18] : memref<36xf32, #tpu.memory_space<smem>>
    %177 = vector.broadcast %176 : f32 to vector<8x256xf32>
    %178 = arith.mulf %177, %75 : vector<8x256xf32>
    %179 = arith.addf %171, %178 : vector<8x256xf32>
    %c19 = arith.constant 19 : index
    %180 = memref.load %arg4[%c19] : memref<36xf32, #tpu.memory_space<smem>>
    %181 = vector.broadcast %180 : f32 to vector<8x256xf32>
    %182 = arith.mulf %181, %75 : vector<8x256xf32>
    %183 = arith.addf %175, %182 : vector<8x256xf32>
    %c255_i32 = arith.constant 255 : i32
    %184 = tpu.dynamic_rotate %60 by %c255_i32 dim 1 : vector<8x256xf32>, i32 -> vector<8x256xf32>
    %185 = vector.broadcast %4 : vector<1x256xf32> to vector<8x256xf32>
    %186 = arith.mulf %184, %185 : vector<8x256xf32>
    %c20 = arith.constant 20 : index
    %187 = memref.load %arg4[%c20] : memref<36xf32, #tpu.memory_space<smem>>
    %188 = vector.broadcast %187 : f32 to vector<8x256xf32>
    %189 = arith.mulf %188, %186 : vector<8x256xf32>
    %190 = arith.addf %179, %189 : vector<8x256xf32>
    %c21 = arith.constant 21 : index
    %191 = memref.load %arg4[%c21] : memref<36xf32, #tpu.memory_space<smem>>
    %192 = vector.broadcast %191 : f32 to vector<8x256xf32>
    %193 = arith.mulf %192, %186 : vector<8x256xf32>
    %194 = arith.addf %183, %193 : vector<8x256xf32>
    %c255_i32_50 = arith.constant 255 : i32
    %195 = tpu.dynamic_rotate %75 by %c255_i32_50 dim 1 : vector<8x256xf32>, i32 -> vector<8x256xf32>
    %196 = vector.broadcast %4 : vector<1x256xf32> to vector<8x256xf32>
    %197 = arith.mulf %195, %196 : vector<8x256xf32>
    %c22 = arith.constant 22 : index
    %198 = memref.load %arg4[%c22] : memref<36xf32, #tpu.memory_space<smem>>
    %199 = vector.broadcast %198 : f32 to vector<8x256xf32>
    %200 = arith.mulf %199, %197 : vector<8x256xf32>
    %201 = arith.addf %190, %200 : vector<8x256xf32>
    %c23 = arith.constant 23 : index
    %202 = memref.load %arg4[%c23] : memref<36xf32, #tpu.memory_space<smem>>
    %203 = vector.broadcast %202 : f32 to vector<8x256xf32>
    %204 = arith.mulf %203, %197 : vector<8x256xf32>
    %205 = arith.addf %194, %204 : vector<8x256xf32>
    %c241_i32 = arith.constant 241 : i32
    %206 = tpu.dynamic_rotate %60 by %c241_i32 dim 1 : vector<8x256xf32>, i32 -> vector<8x256xf32>
    %207 = vector.broadcast %5 : vector<1x256xf32> to vector<8x256xf32>
    %208 = arith.mulf %206, %207 : vector<8x256xf32>
    %c24 = arith.constant 24 : index
    %209 = memref.load %arg4[%c24] : memref<36xf32, #tpu.memory_space<smem>>
    %210 = vector.broadcast %209 : f32 to vector<8x256xf32>
    %211 = arith.mulf %210, %208 : vector<8x256xf32>
    %212 = arith.addf %201, %211 : vector<8x256xf32>
    %c25 = arith.constant 25 : index
    %213 = memref.load %arg4[%c25] : memref<36xf32, #tpu.memory_space<smem>>
    %214 = vector.broadcast %213 : f32 to vector<8x256xf32>
    %215 = arith.mulf %214, %208 : vector<8x256xf32>
    %216 = arith.addf %205, %215 : vector<8x256xf32>
    %c241_i32_51 = arith.constant 241 : i32
    %217 = tpu.dynamic_rotate %75 by %c241_i32_51 dim 1 : vector<8x256xf32>, i32 -> vector<8x256xf32>
    %218 = vector.broadcast %5 : vector<1x256xf32> to vector<8x256xf32>
    %219 = arith.mulf %217, %218 : vector<8x256xf32>
    %c26 = arith.constant 26 : index
    %220 = memref.load %arg4[%c26] : memref<36xf32, #tpu.memory_space<smem>>
    %221 = vector.broadcast %220 : f32 to vector<8x256xf32>
    %222 = arith.mulf %221, %219 : vector<8x256xf32>
    %223 = arith.addf %212, %222 : vector<8x256xf32>
    %c27 = arith.constant 27 : index
    %224 = memref.load %arg4[%c27] : memref<36xf32, #tpu.memory_space<smem>>
    %225 = vector.broadcast %224 : f32 to vector<8x256xf32>
    %226 = arith.mulf %225, %219 : vector<8x256xf32>
    %227 = arith.addf %216, %226 : vector<8x256xf32>
    %c240_i32 = arith.constant 240 : i32
    %228 = tpu.dynamic_rotate %60 by %c240_i32 dim 1 : vector<8x256xf32>, i32 -> vector<8x256xf32>
    %229 = vector.broadcast %6 : vector<1x256xf32> to vector<8x256xf32>
    %230 = arith.mulf %228, %229 : vector<8x256xf32>
    %c28 = arith.constant 28 : index
    %231 = memref.load %arg4[%c28] : memref<36xf32, #tpu.memory_space<smem>>
    %232 = vector.broadcast %231 : f32 to vector<8x256xf32>
    %233 = arith.mulf %232, %230 : vector<8x256xf32>
    %234 = arith.addf %223, %233 : vector<8x256xf32>
    %c29 = arith.constant 29 : index
    %235 = memref.load %arg4[%c29] : memref<36xf32, #tpu.memory_space<smem>>
    %236 = vector.broadcast %235 : f32 to vector<8x256xf32>
    %237 = arith.mulf %236, %230 : vector<8x256xf32>
    %238 = arith.addf %227, %237 : vector<8x256xf32>
    %c240_i32_52 = arith.constant 240 : i32
    %239 = tpu.dynamic_rotate %75 by %c240_i32_52 dim 1 : vector<8x256xf32>, i32 -> vector<8x256xf32>
    %240 = vector.broadcast %6 : vector<1x256xf32> to vector<8x256xf32>
    %241 = arith.mulf %239, %240 : vector<8x256xf32>
    %c30 = arith.constant 30 : index
    %242 = memref.load %arg4[%c30] : memref<36xf32, #tpu.memory_space<smem>>
    %243 = vector.broadcast %242 : f32 to vector<8x256xf32>
    %244 = arith.mulf %243, %241 : vector<8x256xf32>
    %245 = arith.addf %234, %244 : vector<8x256xf32>
    %c31 = arith.constant 31 : index
    %246 = memref.load %arg4[%c31] : memref<36xf32, #tpu.memory_space<smem>>
    %247 = vector.broadcast %246 : f32 to vector<8x256xf32>
    %248 = arith.mulf %247, %241 : vector<8x256xf32>
    %249 = arith.addf %238, %248 : vector<8x256xf32>
    %c239_i32 = arith.constant 239 : i32
    %250 = tpu.dynamic_rotate %60 by %c239_i32 dim 1 : vector<8x256xf32>, i32 -> vector<8x256xf32>
    %251 = vector.broadcast %7 : vector<1x256xf32> to vector<8x256xf32>
    %252 = arith.mulf %250, %251 : vector<8x256xf32>
    %c32 = arith.constant 32 : index
    %253 = memref.load %arg4[%c32] : memref<36xf32, #tpu.memory_space<smem>>
    %254 = vector.broadcast %253 : f32 to vector<8x256xf32>
    %255 = arith.mulf %254, %252 : vector<8x256xf32>
    %256 = arith.addf %245, %255 : vector<8x256xf32>
    %c33 = arith.constant 33 : index
    %257 = memref.load %arg4[%c33] : memref<36xf32, #tpu.memory_space<smem>>
    %258 = vector.broadcast %257 : f32 to vector<8x256xf32>
    %259 = arith.mulf %258, %252 : vector<8x256xf32>
    %260 = arith.addf %249, %259 : vector<8x256xf32>
    %c239_i32_53 = arith.constant 239 : i32
    %261 = tpu.dynamic_rotate %75 by %c239_i32_53 dim 1 : vector<8x256xf32>, i32 -> vector<8x256xf32>
    %262 = vector.broadcast %7 : vector<1x256xf32> to vector<8x256xf32>
    %263 = arith.mulf %261, %262 : vector<8x256xf32>
    %c34 = arith.constant 34 : index
    %264 = memref.load %arg4[%c34] : memref<36xf32, #tpu.memory_space<smem>>
    %265 = vector.broadcast %264 : f32 to vector<8x256xf32>
    %266 = arith.mulf %265, %263 : vector<8x256xf32>
    %267 = arith.addf %256, %266 : vector<8x256xf32>
    %c35 = arith.constant 35 : index
    %268 = memref.load %arg4[%c35] : memref<36xf32, #tpu.memory_space<smem>>
    %269 = vector.broadcast %268 : f32 to vector<8x256xf32>
    %270 = arith.mulf %269, %263 : vector<8x256xf32>
    %271 = arith.addf %260, %270 : vector<8x256xf32>
    %272 = arith.addf %30, %267 : vector<8x256xf32>
    %273 = arith.addf %45, %271 : vector<8x256xf32>
    %c0_54 = arith.constant 0 : index
    %274 = memref.load %arg9[%c0_54] : memref<2xf32, #tpu.memory_space<smem>>
    %275 = vector.broadcast %274 : f32 to vector<8x256xf32>
    %c1_55 = arith.constant 1 : index
    %276 = memref.load %arg9[%c1_55] : memref<2xf32, #tpu.memory_space<smem>>
    %277 = vector.broadcast %276 : f32 to vector<8x256xf32>
    %c0_56 = arith.constant 0 : index
    %278 = memref.load %arg7[%c0_56] : memref<2xf32, #tpu.memory_space<smem>>
    %279 = vector.broadcast %278 : f32 to vector<8x256xf32>
    %c1_57 = arith.constant 1 : index
    %280 = memref.load %arg7[%c1_57] : memref<2xf32, #tpu.memory_space<smem>>
    %281 = vector.broadcast %280 : f32 to vector<8x256xf32>
    %c17_i32_58 = arith.constant 17 : i32
    %282 = tpu.dynamic_rotate %272 by %c17_i32_58 dim 1 : vector<8x256xf32>, i32 -> vector<8x256xf32>
    %283 = vector.broadcast %0 : vector<1x256xf32> to vector<8x256xf32>
    %284 = arith.mulf %282, %283 : vector<8x256xf32>
    %c0_59 = arith.constant 0 : index
    %285 = memref.load %arg8[%c0_59] : memref<36xf32, #tpu.memory_space<smem>>
    %286 = vector.broadcast %285 : f32 to vector<8x256xf32>
    %287 = arith.mulf %286, %284 : vector<8x256xf32>
    %288 = arith.addf %275, %287 : vector<8x256xf32>
    %c1_60 = arith.constant 1 : index
    %289 = memref.load %arg8[%c1_60] : memref<36xf32, #tpu.memory_space<smem>>
    %290 = vector.broadcast %289 : f32 to vector<8x256xf32>
    %291 = arith.mulf %290, %284 : vector<8x256xf32>
    %292 = arith.addf %277, %291 : vector<8x256xf32>
    %c0_61 = arith.constant 0 : index
    %293 = memref.load %arg6[%c0_61] : memref<36xf32, #tpu.memory_space<smem>>
    %294 = vector.broadcast %293 : f32 to vector<8x256xf32>
    %295 = arith.mulf %294, %284 : vector<8x256xf32>
    %296 = arith.addf %279, %295 : vector<8x256xf32>
    %c1_62 = arith.constant 1 : index
    %297 = memref.load %arg6[%c1_62] : memref<36xf32, #tpu.memory_space<smem>>
    %298 = vector.broadcast %297 : f32 to vector<8x256xf32>
    %299 = arith.mulf %298, %284 : vector<8x256xf32>
    %300 = arith.addf %281, %299 : vector<8x256xf32>
    %c17_i32_63 = arith.constant 17 : i32
    %301 = tpu.dynamic_rotate %273 by %c17_i32_63 dim 1 : vector<8x256xf32>, i32 -> vector<8x256xf32>
    %302 = vector.broadcast %0 : vector<1x256xf32> to vector<8x256xf32>
    %303 = arith.mulf %301, %302 : vector<8x256xf32>
    %c2_64 = arith.constant 2 : index
    %304 = memref.load %arg8[%c2_64] : memref<36xf32, #tpu.memory_space<smem>>
    %305 = vector.broadcast %304 : f32 to vector<8x256xf32>
    %306 = arith.mulf %305, %303 : vector<8x256xf32>
    %307 = arith.addf %288, %306 : vector<8x256xf32>
    %c3_65 = arith.constant 3 : index
    %308 = memref.load %arg8[%c3_65] : memref<36xf32, #tpu.memory_space<smem>>
    %309 = vector.broadcast %308 : f32 to vector<8x256xf32>
    %310 = arith.mulf %309, %303 : vector<8x256xf32>
    %311 = arith.addf %292, %310 : vector<8x256xf32>
    %c2_66 = arith.constant 2 : index
    %312 = memref.load %arg6[%c2_66] : memref<36xf32, #tpu.memory_space<smem>>
    %313 = vector.broadcast %312 : f32 to vector<8x256xf32>
    %314 = arith.mulf %313, %303 : vector<8x256xf32>
    %315 = arith.addf %296, %314 : vector<8x256xf32>
    %c3_67 = arith.constant 3 : index
    %316 = memref.load %arg6[%c3_67] : memref<36xf32, #tpu.memory_space<smem>>
    %317 = vector.broadcast %316 : f32 to vector<8x256xf32>
    %318 = arith.mulf %317, %303 : vector<8x256xf32>
    %319 = arith.addf %300, %318 : vector<8x256xf32>
    %c16_i32_68 = arith.constant 16 : i32
    %320 = tpu.dynamic_rotate %272 by %c16_i32_68 dim 1 : vector<8x256xf32>, i32 -> vector<8x256xf32>
    %321 = vector.broadcast %1 : vector<1x256xf32> to vector<8x256xf32>
    %322 = arith.mulf %320, %321 : vector<8x256xf32>
    %c4_69 = arith.constant 4 : index
    %323 = memref.load %arg8[%c4_69] : memref<36xf32, #tpu.memory_space<smem>>
    %324 = vector.broadcast %323 : f32 to vector<8x256xf32>
    %325 = arith.mulf %324, %322 : vector<8x256xf32>
    %326 = arith.addf %307, %325 : vector<8x256xf32>
    %c5_70 = arith.constant 5 : index
    %327 = memref.load %arg8[%c5_70] : memref<36xf32, #tpu.memory_space<smem>>
    %328 = vector.broadcast %327 : f32 to vector<8x256xf32>
    %329 = arith.mulf %328, %322 : vector<8x256xf32>
    %330 = arith.addf %311, %329 : vector<8x256xf32>
    %c4_71 = arith.constant 4 : index
    %331 = memref.load %arg6[%c4_71] : memref<36xf32, #tpu.memory_space<smem>>
    %332 = vector.broadcast %331 : f32 to vector<8x256xf32>
    %333 = arith.mulf %332, %322 : vector<8x256xf32>
    %334 = arith.addf %315, %333 : vector<8x256xf32>
    %c5_72 = arith.constant 5 : index
    %335 = memref.load %arg6[%c5_72] : memref<36xf32, #tpu.memory_space<smem>>
    %336 = vector.broadcast %335 : f32 to vector<8x256xf32>
    %337 = arith.mulf %336, %322 : vector<8x256xf32>
    %338 = arith.addf %319, %337 : vector<8x256xf32>
    %c16_i32_73 = arith.constant 16 : i32
    %339 = tpu.dynamic_rotate %273 by %c16_i32_73 dim 1 : vector<8x256xf32>, i32 -> vector<8x256xf32>
    %340 = vector.broadcast %1 : vector<1x256xf32> to vector<8x256xf32>
    %341 = arith.mulf %339, %340 : vector<8x256xf32>
    %c6_74 = arith.constant 6 : index
    %342 = memref.load %arg8[%c6_74] : memref<36xf32, #tpu.memory_space<smem>>
    %343 = vector.broadcast %342 : f32 to vector<8x256xf32>
    %344 = arith.mulf %343, %341 : vector<8x256xf32>
    %345 = arith.addf %326, %344 : vector<8x256xf32>
    %c7_75 = arith.constant 7 : index
    %346 = memref.load %arg8[%c7_75] : memref<36xf32, #tpu.memory_space<smem>>
    %347 = vector.broadcast %346 : f32 to vector<8x256xf32>
    %348 = arith.mulf %347, %341 : vector<8x256xf32>
    %349 = arith.addf %330, %348 : vector<8x256xf32>
    %c6_76 = arith.constant 6 : index
    %350 = memref.load %arg6[%c6_76] : memref<36xf32, #tpu.memory_space<smem>>
    %351 = vector.broadcast %350 : f32 to vector<8x256xf32>
    %352 = arith.mulf %351, %341 : vector<8x256xf32>
    %353 = arith.addf %334, %352 : vector<8x256xf32>
    %c7_77 = arith.constant 7 : index
    %354 = memref.load %arg6[%c7_77] : memref<36xf32, #tpu.memory_space<smem>>
    %355 = vector.broadcast %354 : f32 to vector<8x256xf32>
    %356 = arith.mulf %355, %341 : vector<8x256xf32>
    %357 = arith.addf %338, %356 : vector<8x256xf32>
    %c15_i32_78 = arith.constant 15 : i32
    %358 = tpu.dynamic_rotate %272 by %c15_i32_78 dim 1 : vector<8x256xf32>, i32 -> vector<8x256xf32>
    %359 = vector.broadcast %2 : vector<1x256xf32> to vector<8x256xf32>
    %360 = arith.mulf %358, %359 : vector<8x256xf32>
    %c8_79 = arith.constant 8 : index
    %361 = memref.load %arg8[%c8_79] : memref<36xf32, #tpu.memory_space<smem>>
    %362 = vector.broadcast %361 : f32 to vector<8x256xf32>
    %363 = arith.mulf %362, %360 : vector<8x256xf32>
    %364 = arith.addf %345, %363 : vector<8x256xf32>
    %c9_80 = arith.constant 9 : index
    %365 = memref.load %arg8[%c9_80] : memref<36xf32, #tpu.memory_space<smem>>
    %366 = vector.broadcast %365 : f32 to vector<8x256xf32>
    %367 = arith.mulf %366, %360 : vector<8x256xf32>
    %368 = arith.addf %349, %367 : vector<8x256xf32>
    %c8_81 = arith.constant 8 : index
    %369 = memref.load %arg6[%c8_81] : memref<36xf32, #tpu.memory_space<smem>>
    %370 = vector.broadcast %369 : f32 to vector<8x256xf32>
    %371 = arith.mulf %370, %360 : vector<8x256xf32>
    %372 = arith.addf %353, %371 : vector<8x256xf32>
    %c9_82 = arith.constant 9 : index
    %373 = memref.load %arg6[%c9_82] : memref<36xf32, #tpu.memory_space<smem>>
    %374 = vector.broadcast %373 : f32 to vector<8x256xf32>
    %375 = arith.mulf %374, %360 : vector<8x256xf32>
    %376 = arith.addf %357, %375 : vector<8x256xf32>
    %c15_i32_83 = arith.constant 15 : i32
    %377 = tpu.dynamic_rotate %273 by %c15_i32_83 dim 1 : vector<8x256xf32>, i32 -> vector<8x256xf32>
    %378 = vector.broadcast %2 : vector<1x256xf32> to vector<8x256xf32>
    %379 = arith.mulf %377, %378 : vector<8x256xf32>
    %c10_84 = arith.constant 10 : index
    %380 = memref.load %arg8[%c10_84] : memref<36xf32, #tpu.memory_space<smem>>
    %381 = vector.broadcast %380 : f32 to vector<8x256xf32>
    %382 = arith.mulf %381, %379 : vector<8x256xf32>
    %383 = arith.addf %364, %382 : vector<8x256xf32>
    %c11_85 = arith.constant 11 : index
    %384 = memref.load %arg8[%c11_85] : memref<36xf32, #tpu.memory_space<smem>>
    %385 = vector.broadcast %384 : f32 to vector<8x256xf32>
    %386 = arith.mulf %385, %379 : vector<8x256xf32>
    %387 = arith.addf %368, %386 : vector<8x256xf32>
    %c10_86 = arith.constant 10 : index
    %388 = memref.load %arg6[%c10_86] : memref<36xf32, #tpu.memory_space<smem>>
    %389 = vector.broadcast %388 : f32 to vector<8x256xf32>
    %390 = arith.mulf %389, %379 : vector<8x256xf32>
    %391 = arith.addf %372, %390 : vector<8x256xf32>
    %c11_87 = arith.constant 11 : index
    %392 = memref.load %arg6[%c11_87] : memref<36xf32, #tpu.memory_space<smem>>
    %393 = vector.broadcast %392 : f32 to vector<8x256xf32>
    %394 = arith.mulf %393, %379 : vector<8x256xf32>
    %395 = arith.addf %376, %394 : vector<8x256xf32>
    %c1_i32_88 = arith.constant 1 : i32
    %396 = tpu.dynamic_rotate %272 by %c1_i32_88 dim 1 : vector<8x256xf32>, i32 -> vector<8x256xf32>
    %397 = vector.broadcast %3 : vector<1x256xf32> to vector<8x256xf32>
    %398 = arith.mulf %396, %397 : vector<8x256xf32>
    %c12_89 = arith.constant 12 : index
    %399 = memref.load %arg8[%c12_89] : memref<36xf32, #tpu.memory_space<smem>>
    %400 = vector.broadcast %399 : f32 to vector<8x256xf32>
    %401 = arith.mulf %400, %398 : vector<8x256xf32>
    %402 = arith.addf %383, %401 : vector<8x256xf32>
    %c13_90 = arith.constant 13 : index
    %403 = memref.load %arg8[%c13_90] : memref<36xf32, #tpu.memory_space<smem>>
    %404 = vector.broadcast %403 : f32 to vector<8x256xf32>
    %405 = arith.mulf %404, %398 : vector<8x256xf32>
    %406 = arith.addf %387, %405 : vector<8x256xf32>
    %c12_91 = arith.constant 12 : index
    %407 = memref.load %arg6[%c12_91] : memref<36xf32, #tpu.memory_space<smem>>
    %408 = vector.broadcast %407 : f32 to vector<8x256xf32>
    %409 = arith.mulf %408, %398 : vector<8x256xf32>
    %410 = arith.addf %391, %409 : vector<8x256xf32>
    %c13_92 = arith.constant 13 : index
    %411 = memref.load %arg6[%c13_92] : memref<36xf32, #tpu.memory_space<smem>>
    %412 = vector.broadcast %411 : f32 to vector<8x256xf32>
    %413 = arith.mulf %412, %398 : vector<8x256xf32>
    %414 = arith.addf %395, %413 : vector<8x256xf32>
    %c1_i32_93 = arith.constant 1 : i32
    %415 = tpu.dynamic_rotate %273 by %c1_i32_93 dim 1 : vector<8x256xf32>, i32 -> vector<8x256xf32>
    %416 = vector.broadcast %3 : vector<1x256xf32> to vector<8x256xf32>
    %417 = arith.mulf %415, %416 : vector<8x256xf32>
    %c14_94 = arith.constant 14 : index
    %418 = memref.load %arg8[%c14_94] : memref<36xf32, #tpu.memory_space<smem>>
    %419 = vector.broadcast %418 : f32 to vector<8x256xf32>
    %420 = arith.mulf %419, %417 : vector<8x256xf32>
    %421 = arith.addf %402, %420 : vector<8x256xf32>
    %c15_95 = arith.constant 15 : index
    %422 = memref.load %arg8[%c15_95] : memref<36xf32, #tpu.memory_space<smem>>
    %423 = vector.broadcast %422 : f32 to vector<8x256xf32>
    %424 = arith.mulf %423, %417 : vector<8x256xf32>
    %425 = arith.addf %406, %424 : vector<8x256xf32>
    %c14_96 = arith.constant 14 : index
    %426 = memref.load %arg6[%c14_96] : memref<36xf32, #tpu.memory_space<smem>>
    %427 = vector.broadcast %426 : f32 to vector<8x256xf32>
    %428 = arith.mulf %427, %417 : vector<8x256xf32>
    %429 = arith.addf %410, %428 : vector<8x256xf32>
    %c15_97 = arith.constant 15 : index
    %430 = memref.load %arg6[%c15_97] : memref<36xf32, #tpu.memory_space<smem>>
    %431 = vector.broadcast %430 : f32 to vector<8x256xf32>
    %432 = arith.mulf %431, %417 : vector<8x256xf32>
    %433 = arith.addf %414, %432 : vector<8x256xf32>
    %c16_98 = arith.constant 16 : index
    %434 = memref.load %arg8[%c16_98] : memref<36xf32, #tpu.memory_space<smem>>
    %435 = vector.broadcast %434 : f32 to vector<8x256xf32>
    %436 = arith.mulf %435, %272 : vector<8x256xf32>
    %437 = arith.addf %421, %436 : vector<8x256xf32>
    %c17_99 = arith.constant 17 : index
    %438 = memref.load %arg8[%c17_99] : memref<36xf32, #tpu.memory_space<smem>>
    %439 = vector.broadcast %438 : f32 to vector<8x256xf32>
    %440 = arith.mulf %439, %272 : vector<8x256xf32>
    %441 = arith.addf %425, %440 : vector<8x256xf32>
    %c16_100 = arith.constant 16 : index
    %442 = memref.load %arg6[%c16_100] : memref<36xf32, #tpu.memory_space<smem>>
    %443 = vector.broadcast %442 : f32 to vector<8x256xf32>
    %444 = arith.mulf %443, %272 : vector<8x256xf32>
    %445 = arith.addf %429, %444 : vector<8x256xf32>
    %c17_101 = arith.constant 17 : index
    %446 = memref.load %arg6[%c17_101] : memref<36xf32, #tpu.memory_space<smem>>
    %447 = vector.broadcast %446 : f32 to vector<8x256xf32>
    %448 = arith.mulf %447, %272 : vector<8x256xf32>
    %449 = arith.addf %433, %448 : vector<8x256xf32>
    %c18_102 = arith.constant 18 : index
    %450 = memref.load %arg8[%c18_102] : memref<36xf32, #tpu.memory_space<smem>>
    %451 = vector.broadcast %450 : f32 to vector<8x256xf32>
    %452 = arith.mulf %451, %273 : vector<8x256xf32>
    %453 = arith.addf %437, %452 : vector<8x256xf32>
    %c19_103 = arith.constant 19 : index
    %454 = memref.load %arg8[%c19_103] : memref<36xf32, #tpu.memory_space<smem>>
    %455 = vector.broadcast %454 : f32 to vector<8x256xf32>
    %456 = arith.mulf %455, %273 : vector<8x256xf32>
    %457 = arith.addf %441, %456 : vector<8x256xf32>
    %c18_104 = arith.constant 18 : index
    %458 = memref.load %arg6[%c18_104] : memref<36xf32, #tpu.memory_space<smem>>
    %459 = vector.broadcast %458 : f32 to vector<8x256xf32>
    %460 = arith.mulf %459, %273 : vector<8x256xf32>
    %461 = arith.addf %445, %460 : vector<8x256xf32>
    %c19_105 = arith.constant 19 : index
    %462 = memref.load %arg6[%c19_105] : memref<36xf32, #tpu.memory_space<smem>>
    %463 = vector.broadcast %462 : f32 to vector<8x256xf32>
    %464 = arith.mulf %463, %273 : vector<8x256xf32>
    %465 = arith.addf %449, %464 : vector<8x256xf32>
    %c255_i32_106 = arith.constant 255 : i32
    %466 = tpu.dynamic_rotate %272 by %c255_i32_106 dim 1 : vector<8x256xf32>, i32 -> vector<8x256xf32>
    %467 = vector.broadcast %4 : vector<1x256xf32> to vector<8x256xf32>
    %468 = arith.mulf %466, %467 : vector<8x256xf32>
    %c20_107 = arith.constant 20 : index
    %469 = memref.load %arg8[%c20_107] : memref<36xf32, #tpu.memory_space<smem>>
    %470 = vector.broadcast %469 : f32 to vector<8x256xf32>
    %471 = arith.mulf %470, %468 : vector<8x256xf32>
    %472 = arith.addf %453, %471 : vector<8x256xf32>
    %c21_108 = arith.constant 21 : index
    %473 = memref.load %arg8[%c21_108] : memref<36xf32, #tpu.memory_space<smem>>
    %474 = vector.broadcast %473 : f32 to vector<8x256xf32>
    %475 = arith.mulf %474, %468 : vector<8x256xf32>
    %476 = arith.addf %457, %475 : vector<8x256xf32>
    %c20_109 = arith.constant 20 : index
    %477 = memref.load %arg6[%c20_109] : memref<36xf32, #tpu.memory_space<smem>>
    %478 = vector.broadcast %477 : f32 to vector<8x256xf32>
    %479 = arith.mulf %478, %468 : vector<8x256xf32>
    %480 = arith.addf %461, %479 : vector<8x256xf32>
    %c21_110 = arith.constant 21 : index
    %481 = memref.load %arg6[%c21_110] : memref<36xf32, #tpu.memory_space<smem>>
    %482 = vector.broadcast %481 : f32 to vector<8x256xf32>
    %483 = arith.mulf %482, %468 : vector<8x256xf32>
    %484 = arith.addf %465, %483 : vector<8x256xf32>
    %c255_i32_111 = arith.constant 255 : i32
    %485 = tpu.dynamic_rotate %273 by %c255_i32_111 dim 1 : vector<8x256xf32>, i32 -> vector<8x256xf32>
    %486 = vector.broadcast %4 : vector<1x256xf32> to vector<8x256xf32>
    %487 = arith.mulf %485, %486 : vector<8x256xf32>
    %c22_112 = arith.constant 22 : index
    %488 = memref.load %arg8[%c22_112] : memref<36xf32, #tpu.memory_space<smem>>
    %489 = vector.broadcast %488 : f32 to vector<8x256xf32>
    %490 = arith.mulf %489, %487 : vector<8x256xf32>
    %491 = arith.addf %472, %490 : vector<8x256xf32>
    %c23_113 = arith.constant 23 : index
    %492 = memref.load %arg8[%c23_113] : memref<36xf32, #tpu.memory_space<smem>>
    %493 = vector.broadcast %492 : f32 to vector<8x256xf32>
    %494 = arith.mulf %493, %487 : vector<8x256xf32>
    %495 = arith.addf %476, %494 : vector<8x256xf32>
    %c22_114 = arith.constant 22 : index
    %496 = memref.load %arg6[%c22_114] : memref<36xf32, #tpu.memory_space<smem>>
    %497 = vector.broadcast %496 : f32 to vector<8x256xf32>
    %498 = arith.mulf %497, %487 : vector<8x256xf32>
    %499 = arith.addf %480, %498 : vector<8x256xf32>
    %c23_115 = arith.constant 23 : index
    %500 = memref.load %arg6[%c23_115] : memref<36xf32, #tpu.memory_space<smem>>
    %501 = vector.broadcast %500 : f32 to vector<8x256xf32>
    %502 = arith.mulf %501, %487 : vector<8x256xf32>
    %503 = arith.addf %484, %502 : vector<8x256xf32>
    %c241_i32_116 = arith.constant 241 : i32
    %504 = tpu.dynamic_rotate %272 by %c241_i32_116 dim 1 : vector<8x256xf32>, i32 -> vector<8x256xf32>
    %505 = vector.broadcast %5 : vector<1x256xf32> to vector<8x256xf32>
    %506 = arith.mulf %504, %505 : vector<8x256xf32>
    %c24_117 = arith.constant 24 : index
    %507 = memref.load %arg8[%c24_117] : memref<36xf32, #tpu.memory_space<smem>>
    %508 = vector.broadcast %507 : f32 to vector<8x256xf32>
    %509 = arith.mulf %508, %506 : vector<8x256xf32>
    %510 = arith.addf %491, %509 : vector<8x256xf32>
    %c25_118 = arith.constant 25 : index
    %511 = memref.load %arg8[%c25_118] : memref<36xf32, #tpu.memory_space<smem>>
    %512 = vector.broadcast %511 : f32 to vector<8x256xf32>
    %513 = arith.mulf %512, %506 : vector<8x256xf32>
    %514 = arith.addf %495, %513 : vector<8x256xf32>
    %c24_119 = arith.constant 24 : index
    %515 = memref.load %arg6[%c24_119] : memref<36xf32, #tpu.memory_space<smem>>
    %516 = vector.broadcast %515 : f32 to vector<8x256xf32>
    %517 = arith.mulf %516, %506 : vector<8x256xf32>
    %518 = arith.addf %499, %517 : vector<8x256xf32>
    %c25_120 = arith.constant 25 : index
    %519 = memref.load %arg6[%c25_120] : memref<36xf32, #tpu.memory_space<smem>>
    %520 = vector.broadcast %519 : f32 to vector<8x256xf32>
    %521 = arith.mulf %520, %506 : vector<8x256xf32>
    %522 = arith.addf %503, %521 : vector<8x256xf32>
    %c241_i32_121 = arith.constant 241 : i32
    %523 = tpu.dynamic_rotate %273 by %c241_i32_121 dim 1 : vector<8x256xf32>, i32 -> vector<8x256xf32>
    %524 = vector.broadcast %5 : vector<1x256xf32> to vector<8x256xf32>
    %525 = arith.mulf %523, %524 : vector<8x256xf32>
    %c26_122 = arith.constant 26 : index
    %526 = memref.load %arg8[%c26_122] : memref<36xf32, #tpu.memory_space<smem>>
    %527 = vector.broadcast %526 : f32 to vector<8x256xf32>
    %528 = arith.mulf %527, %525 : vector<8x256xf32>
    %529 = arith.addf %510, %528 : vector<8x256xf32>
    %c27_123 = arith.constant 27 : index
    %530 = memref.load %arg8[%c27_123] : memref<36xf32, #tpu.memory_space<smem>>
    %531 = vector.broadcast %530 : f32 to vector<8x256xf32>
    %532 = arith.mulf %531, %525 : vector<8x256xf32>
    %533 = arith.addf %514, %532 : vector<8x256xf32>
    %c26_124 = arith.constant 26 : index
    %534 = memref.load %arg6[%c26_124] : memref<36xf32, #tpu.memory_space<smem>>
    %535 = vector.broadcast %534 : f32 to vector<8x256xf32>
    %536 = arith.mulf %535, %525 : vector<8x256xf32>
    %537 = arith.addf %518, %536 : vector<8x256xf32>
    %c27_125 = arith.constant 27 : index
    %538 = memref.load %arg6[%c27_125] : memref<36xf32, #tpu.memory_space<smem>>
    %539 = vector.broadcast %538 : f32 to vector<8x256xf32>
    %540 = arith.mulf %539, %525 : vector<8x256xf32>
    %541 = arith.addf %522, %540 : vector<8x256xf32>
    %c240_i32_126 = arith.constant 240 : i32
    %542 = tpu.dynamic_rotate %272 by %c240_i32_126 dim 1 : vector<8x256xf32>, i32 -> vector<8x256xf32>
    %543 = vector.broadcast %6 : vector<1x256xf32> to vector<8x256xf32>
    %544 = arith.mulf %542, %543 : vector<8x256xf32>
    %c28_127 = arith.constant 28 : index
    %545 = memref.load %arg8[%c28_127] : memref<36xf32, #tpu.memory_space<smem>>
    %546 = vector.broadcast %545 : f32 to vector<8x256xf32>
    %547 = arith.mulf %546, %544 : vector<8x256xf32>
    %548 = arith.addf %529, %547 : vector<8x256xf32>
    %c29_128 = arith.constant 29 : index
    %549 = memref.load %arg8[%c29_128] : memref<36xf32, #tpu.memory_space<smem>>
    %550 = vector.broadcast %549 : f32 to vector<8x256xf32>
    %551 = arith.mulf %550, %544 : vector<8x256xf32>
    %552 = arith.addf %533, %551 : vector<8x256xf32>
    %c28_129 = arith.constant 28 : index
    %553 = memref.load %arg6[%c28_129] : memref<36xf32, #tpu.memory_space<smem>>
    %554 = vector.broadcast %553 : f32 to vector<8x256xf32>
    %555 = arith.mulf %554, %544 : vector<8x256xf32>
    %556 = arith.addf %537, %555 : vector<8x256xf32>
    %c29_130 = arith.constant 29 : index
    %557 = memref.load %arg6[%c29_130] : memref<36xf32, #tpu.memory_space<smem>>
    %558 = vector.broadcast %557 : f32 to vector<8x256xf32>
    %559 = arith.mulf %558, %544 : vector<8x256xf32>
    %560 = arith.addf %541, %559 : vector<8x256xf32>
    %c240_i32_131 = arith.constant 240 : i32
    %561 = tpu.dynamic_rotate %273 by %c240_i32_131 dim 1 : vector<8x256xf32>, i32 -> vector<8x256xf32>
    %562 = vector.broadcast %6 : vector<1x256xf32> to vector<8x256xf32>
    %563 = arith.mulf %561, %562 : vector<8x256xf32>
    %c30_132 = arith.constant 30 : index
    %564 = memref.load %arg8[%c30_132] : memref<36xf32, #tpu.memory_space<smem>>
    %565 = vector.broadcast %564 : f32 to vector<8x256xf32>
    %566 = arith.mulf %565, %563 : vector<8x256xf32>
    %567 = arith.addf %548, %566 : vector<8x256xf32>
    %c31_133 = arith.constant 31 : index
    %568 = memref.load %arg8[%c31_133] : memref<36xf32, #tpu.memory_space<smem>>
    %569 = vector.broadcast %568 : f32 to vector<8x256xf32>
    %570 = arith.mulf %569, %563 : vector<8x256xf32>
    %571 = arith.addf %552, %570 : vector<8x256xf32>
    %c30_134 = arith.constant 30 : index
    %572 = memref.load %arg6[%c30_134] : memref<36xf32, #tpu.memory_space<smem>>
    %573 = vector.broadcast %572 : f32 to vector<8x256xf32>
    %574 = arith.mulf %573, %563 : vector<8x256xf32>
    %575 = arith.addf %556, %574 : vector<8x256xf32>
    %c31_135 = arith.constant 31 : index
    %576 = memref.load %arg6[%c31_135] : memref<36xf32, #tpu.memory_space<smem>>
    %577 = vector.broadcast %576 : f32 to vector<8x256xf32>
    %578 = arith.mulf %577, %563 : vector<8x256xf32>
    %579 = arith.addf %560, %578 : vector<8x256xf32>
    %c239_i32_136 = arith.constant 239 : i32
    %580 = tpu.dynamic_rotate %272 by %c239_i32_136 dim 1 : vector<8x256xf32>, i32 -> vector<8x256xf32>
    %581 = vector.broadcast %7 : vector<1x256xf32> to vector<8x256xf32>
    %582 = arith.mulf %580, %581 : vector<8x256xf32>
    %c32_137 = arith.constant 32 : index
    %583 = memref.load %arg8[%c32_137] : memref<36xf32, #tpu.memory_space<smem>>
    %584 = vector.broadcast %583 : f32 to vector<8x256xf32>
    %585 = arith.mulf %584, %582 : vector<8x256xf32>
    %586 = arith.addf %567, %585 : vector<8x256xf32>
    %c33_138 = arith.constant 33 : index
    %587 = memref.load %arg8[%c33_138] : memref<36xf32, #tpu.memory_space<smem>>
    %588 = vector.broadcast %587 : f32 to vector<8x256xf32>
    %589 = arith.mulf %588, %582 : vector<8x256xf32>
    %590 = arith.addf %571, %589 : vector<8x256xf32>
    %c32_139 = arith.constant 32 : index
    %591 = memref.load %arg6[%c32_139] : memref<36xf32, #tpu.memory_space<smem>>
    %592 = vector.broadcast %591 : f32 to vector<8x256xf32>
    %593 = arith.mulf %592, %582 : vector<8x256xf32>
    %594 = arith.addf %575, %593 : vector<8x256xf32>
    %c33_140 = arith.constant 33 : index
    %595 = memref.load %arg6[%c33_140] : memref<36xf32, #tpu.memory_space<smem>>
    %596 = vector.broadcast %595 : f32 to vector<8x256xf32>
    %597 = arith.mulf %596, %582 : vector<8x256xf32>
    %598 = arith.addf %579, %597 : vector<8x256xf32>
    %c239_i32_141 = arith.constant 239 : i32
    %599 = tpu.dynamic_rotate %273 by %c239_i32_141 dim 1 : vector<8x256xf32>, i32 -> vector<8x256xf32>
    %600 = vector.broadcast %7 : vector<1x256xf32> to vector<8x256xf32>
    %601 = arith.mulf %599, %600 : vector<8x256xf32>
    %c34_142 = arith.constant 34 : index
    %602 = memref.load %arg8[%c34_142] : memref<36xf32, #tpu.memory_space<smem>>
    %603 = vector.broadcast %602 : f32 to vector<8x256xf32>
    %604 = arith.mulf %603, %601 : vector<8x256xf32>
    %605 = arith.addf %586, %604 : vector<8x256xf32>
    %c35_143 = arith.constant 35 : index
    %606 = memref.load %arg8[%c35_143] : memref<36xf32, #tpu.memory_space<smem>>
    %607 = vector.broadcast %606 : f32 to vector<8x256xf32>
    %608 = arith.mulf %607, %601 : vector<8x256xf32>
    %609 = arith.addf %590, %608 : vector<8x256xf32>
    %c34_144 = arith.constant 34 : index
    %610 = memref.load %arg6[%c34_144] : memref<36xf32, #tpu.memory_space<smem>>
    %611 = vector.broadcast %610 : f32 to vector<8x256xf32>
    %612 = arith.mulf %611, %601 : vector<8x256xf32>
    %613 = arith.addf %594, %612 : vector<8x256xf32>
    %c35_145 = arith.constant 35 : index
    %614 = memref.load %arg6[%c35_145] : memref<36xf32, #tpu.memory_space<smem>>
    %615 = vector.broadcast %614 : f32 to vector<8x256xf32>
    %616 = arith.mulf %615, %601 : vector<8x256xf32>
    %617 = arith.addf %598, %616 : vector<8x256xf32>
    %618 = math.tanh %605 : vector<8x256xf32>
    %cst = arith.constant 8.000000e-01 : f32
    %619 = vector.broadcast %cst : f32 to vector<8x256xf32>
    %620 = arith.mulf %619, %618 : vector<8x256xf32>
    %621 = math.exp %620 : vector<8x256xf32>
    %622 = arith.mulf %60, %621 : vector<8x256xf32>
    %623 = arith.addf %622, %613 : vector<8x256xf32>
    %624 = math.tanh %609 : vector<8x256xf32>
    %cst_146 = arith.constant 8.000000e-01 : f32
    %625 = vector.broadcast %cst_146 : f32 to vector<8x256xf32>
    %626 = arith.mulf %625, %624 : vector<8x256xf32>
    %627 = math.exp %626 : vector<8x256xf32>
    %628 = arith.mulf %75, %627 : vector<8x256xf32>
    %629 = arith.addf %628, %617 : vector<8x256xf32>
    %c0_147 = arith.constant 0 : index
    %c0_148 = arith.constant 0 : index
    %c0_149 = arith.constant 0 : index
    %630 = vector.load %arg10[%c0_147, %c0_148, %c0_149] : memref<4x8x256xf32, #tpu.memory_space<vmem>>, vector<1x8x256xf32>
    %631 = vector.shape_cast %630 : vector<1x8x256xf32> to vector<8x256xf32>
    %632 = vector.shape_cast %272 : vector<8x256xf32> to vector<1x8x256xf32>
    tpu.vector_store %arg10[%c0_147, %c0_148, %c0_149], %632 {strides = array<i32>} : memref<4x8x256xf32, #tpu.memory_space<vmem>>, vector<1x8x256xf32>,
    %c1_150 = arith.constant 1 : index
    %c0_151 = arith.constant 0 : index
    %c0_152 = arith.constant 0 : index
    %633 = vector.load %arg10[%c1_150, %c0_151, %c0_152] : memref<4x8x256xf32, #tpu.memory_space<vmem>>, vector<1x8x256xf32>
    %634 = vector.shape_cast %633 : vector<1x8x256xf32> to vector<8x256xf32>
    %635 = vector.shape_cast %273 : vector<8x256xf32> to vector<1x8x256xf32>
    tpu.vector_store %arg10[%c1_150, %c0_151, %c0_152], %635 {strides = array<i32>} : memref<4x8x256xf32, #tpu.memory_space<vmem>>, vector<1x8x256xf32>,
    %c2_153 = arith.constant 2 : index
    %c0_154 = arith.constant 0 : index
    %c0_155 = arith.constant 0 : index
    %636 = vector.load %arg10[%c2_153, %c0_154, %c0_155] : memref<4x8x256xf32, #tpu.memory_space<vmem>>, vector<1x8x256xf32>
    %637 = vector.shape_cast %636 : vector<1x8x256xf32> to vector<8x256xf32>
    %638 = vector.shape_cast %623 : vector<8x256xf32> to vector<1x8x256xf32>
    tpu.vector_store %arg10[%c2_153, %c0_154, %c0_155], %638 {strides = array<i32>} : memref<4x8x256xf32, #tpu.memory_space<vmem>>, vector<1x8x256xf32>,
    %c3_156 = arith.constant 3 : index
    %c0_157 = arith.constant 0 : index
    %c0_158 = arith.constant 0 : index
    %639 = vector.load %arg10[%c3_156, %c0_157, %c0_158] : memref<4x8x256xf32, #tpu.memory_space<vmem>>, vector<1x8x256xf32>
    %640 = vector.shape_cast %639 : vector<1x8x256xf32> to vector<8x256xf32>
    %641 = vector.shape_cast %629 : vector<8x256xf32> to vector<1x8x256xf32>
    tpu.vector_store %arg10[%c3_156, %c0_157, %c0_158], %641 {strides = array<i32>} : memref<4x8x256xf32, #tpu.memory_space<vmem>>, vector<1x8x256xf32>,
    return
  }
  func.func @transform_0(%arg0: i32) -> (i32, i32, i32) {
    %c0_i32 = arith.constant 0 : i32
    %c0_i32_0 = arith.constant 0 : i32
    %c0_i32_1 = arith.constant 0 : i32
    return %c0_i32, %arg0, %c0_i32_0 : i32, i32, i32
  }
  func.func @transform_1(%arg0: i32) -> (i32, i32) {
    %c0_i32 = arith.constant 0 : i32
    %c0_i32_0 = arith.constant 0 : i32
    %c0_i32_1 = arith.constant 0 : i32
    return %c0_i32, %c0_i32_0 : i32, i32
  }
  func.func @transform_2(%arg0: i32) -> i32 {
    %c0_i32 = arith.constant 0 : i32
    %c0_i32_0 = arith.constant 0 : i32
    return %c0_i32 : i32
  }
  func.func @transform_3(%arg0: i32) -> i32 {
    %c0_i32 = arith.constant 0 : i32
    %c0_i32_0 = arith.constant 0 : i32
    return %c0_i32 : i32
  }
  func.func @transform_4(%arg0: i32) -> i32 {
    %c0_i32 = arith.constant 0 : i32
    %c0_i32_0 = arith.constant 0 : i32
    return %c0_i32 : i32
  }
  func.func @transform_5(%arg0: i32) -> i32 {
    %c0_i32 = arith.constant 0 : i32
    %c0_i32_0 = arith.constant 0 : i32
    return %c0_i32 : i32
  }
  func.func @transform_6(%arg0: i32) -> i32 {
    %c0_i32 = arith.constant 0 : i32
    %c0_i32_0 = arith.constant 0 : i32
    return %c0_i32 : i32
  }
  func.func @transform_7(%arg0: i32) -> i32 {
    %c0_i32 = arith.constant 0 : i32
    %c0_i32_0 = arith.constant 0 : i32
    return %c0_i32 : i32
  }
  func.func @transform_8(%arg0: i32) -> i32 {
    %c0_i32 = arith.constant 0 : i32
    %c0_i32_0 = arith.constant 0 : i32
    return %c0_i32 : i32
  }
  func.func @transform_9(%arg0: i32) -> (i32, i32, i32) {
    %c0_i32 = arith.constant 0 : i32
    %c0_i32_0 = arith.constant 0 : i32
    %c0_i32_1 = arith.constant 0 : i32
    return %c0_i32, %arg0, %c0_i32_0 : i32, i32, i32
  }
}

</mosaic_0001>

<llo_original>
// kernel: tpu_custom_call.1
$region0: #{tpu_custom_call.1}
  #allocation0 [shape = 'u32[]', space=smem, size = 0x4, offset = 0x4, fixed_abs, tag = 'smem constant byte address 0x4 - core index']
  #allocation1 [shape = 'u32[144,128]{1,0:T(1,128)}', space=vmem, size = 0x12000, scoped, tag = 'internal scratch']
  %s0 = inlined_call_operand.hbm [shape: f32[4,16,256], index: 0, kind: input, shape index: {}]
  %s1 = inlined_call_operand.hbm [shape: f32[8,256], index: 1, kind: input, shape index: {}]
  %s2 = inlined_call_operand.vmem [shape: f32[16], index: 2, kind: input, shape index: {}]
  %s3 = inlined_call_operand.vmem [shape: f32[36], index: 3, kind: input, shape index: {}]
  %s4 = inlined_call_operand.vmem [shape: f32[2], index: 4, kind: input, shape index: {}]
  %s5 = inlined_call_operand.vmem [shape: f32[36], index: 5, kind: input, shape index: {}]
  %s6 = inlined_call_operand.vmem [shape: f32[2], index: 6, kind: input, shape index: {}]
  %s7 = inlined_call_operand.vmem [shape: f32[36], index: 7, kind: input, shape index: {}]
  %s8 = inlined_call_operand.vmem [shape: f32[2], index: 8, kind: input, shape index: {}]
  %s9 = inlined_call_operand.hbm [shape: f32[4,16,256], index: 9, kind: output, shape index: {}]
  %s10 = sld [smem:[#allocation0]]
  $region105: #{tpu_custom_call.1} parent=0
    _
  %s12 = ssub.s32 1, %s10
  %s13 = scalar_select 0, %s12, %s10
  $region1: #{tpu_custom_call.1} parent=0
    #allocation2 [shape = 'u8[65536]{0}', space=vmem, size = 0x10000, scoped, tag = 'input window, operand 0']
    #allocation3 [shape = 's32[2]{0}', space=sflag, size = 0x8, scoped, tag = 'scoped memory for tpu_custom_call.1']
    #allocation4 [shape = 's32[2]{0}', space=sflag, size = 0x8, scoped, tag = 'scoped memory for tpu_custom_call.1']
    #allocation5 [shape = 's32[2]{0}', space=sflag, size = 0x8, scoped, tag = 'scoped memory for tpu_custom_call.1']
    #allocation6 [shape = 'u8[8192]{0}', space=vmem, size = 0x2000, scoped, tag = 'input window, operand 1, single buffered']
    #allocation7 [shape = 's32[1]{0}', space=sflag, size = 0x4, scoped, tag = 'scoped memory for tpu_custom_call.1']
    #allocation8 [shape = 'u8[512]{0}', space=smem, size = 0x200, scoped, tag = 'input window, operand 2, single buffered']
    #allocation9 [shape = 'u8[512]{0}', space=smem, size = 0x200, scoped, tag = 'input window, operand 3, single buffered']
    #allocation10 [shape = 's32[1]{0}', space=sflag, size = 0x4, scoped, tag = 'scoped memory for tpu_custom_call.1']
    #allocation11 [shape = 'u8[512]{0}', space=smem, size = 0x200, scoped, tag = 'input window, operand 4, single buffered']
    #allocation12 [shape = 'u8[512]{0}', space=smem, size = 0x200, scoped, tag = 'input window, operand 5, single buffered']
    #allocation13 [shape = 's32[1]{0}', space=sflag, size = 0x4, scoped, tag = 'scoped memory for tpu_custom_call.1']
    #allocation14 [shape = 'u8[512]{0}', space=smem, size = 0x200, scoped, tag = 'input window, operand 6, single buffered']
    #allocation15 [shape = 'u8[512]{0}', space=smem, size = 0x200, scoped, tag = 'input window, operand 7, single buffered']
    #allocation16 [shape = 's32[1]{0}', space=sflag, size = 0x4, scoped, tag = 'scoped memory for tpu_custom_call.1']
    #allocation17 [shape = 'u8[512]{0}', space=smem, size = 0x200, scoped, tag = 'input window, operand 8, single buffered']
    #allocation18 [shape = 'u8[65536]{0}', space=vmem, size = 0x10000, scoped, tag = 'output window, operand 0']
    %14 = vsyncpa [#allocation3], 0
    %s15 = scalar_lea.sflag [#allocation3], 1
    %16 = vsyncpa %s15, 0
    %17 = vsyncpa [#allocation7], 0
    %18 = vsyncpa [#allocation5], 0
    %19 = vsyncpa [#allocation10], 0
    %20 = vsyncpa [#allocation13], 0
    %21 = vsyncpa [#allocation16], 0
    %22 = vsyncpa [#allocation4], 0
    %s23 = scalar_lea.sflag [#allocation4], 1
    %24 = vsyncpa %s23, 0
    loop: start=0, step=1, limit=4
    $region2: #{tpu_custom_call.1} parent=1 // loop_pre_header
      _
    $region3: #{tpu_custom_call.1} parent=1 // loop_header
      %s26 = sphi 0, %s30
      %p27 = scmp.ge.s32.totalorder %s26, 4
      %s36 = sphi 0, %s38
      %s39 = sphi 0, %s36
      %s40 = sphi 0, %s39
      %s56 = sphi 0, %s40
      %s60 = sphi 0, %s60
      %s62 = sphi 0, %s60
      %s63 = sphi 0, %s62
      %s77 = sphi 0, %s63
      %s81 = sphi 0, %s81
      %s83 = sphi 0, %s81
      %s84 = sphi 0, %s83
      %s98 = sphi 0, %s84
      %s102 = sphi 0, %s102
      %s104 = sphi 0, %s102
      %s105 = sphi 0, %s104
      %s119 = sphi 0, %s105
      %s123 = sphi 0, %s123
      %s125 = sphi 0, %s123
      %s126 = sphi 0, %s125
      %s140 = sphi 0, %s126
      %s144 = sphi 0, %s144
      %s146 = sphi 0, %s144
      %s147 = sphi 0, %s146
      %s161 = sphi 0, %s147
      %s165 = sphi 0, %s165
      %s167 = sphi 0, %s165
      %s168 = sphi 0, %s167
      %s182 = sphi 0, %s168
      %s186 = sphi 0, %s186
      %s188 = sphi 0, %s186
      %s189 = sphi 0, %s188
      %s203 = sphi 0, %s189
      %s207 = sphi 0, %s207
      %s209 = sphi 0, %s207
      %s210 = sphi 0, %s209
      %s224 = sphi 0, %s210
      %s230 = sphi 0, %s232
      %s233 = sphi 0, %s230
      %s234 = sphi 0, %s233
      %s250 = sphi 0, %s234
    $region4: #{tpu_custom_call.1} parent=1 // loop_header_branch
      %29 = sbr.rel (%p27) target = $region8
    $region5: #{tpu_custom_call.1} parent=1 // loop_body
      %s31 = ssub.s32 %s26, 1
      %s32 = ssub.s32 %s26, 2
      %s33 = sadd.s32 %s26, 1
      %s34 = ssub.s32 %s26, %s33
      %p35 = scmp.eq.s32.totalorder %s34, 0
      %s37 = sadd.s32 %s36, 1
      %s38 = scalar_select %p35, %s36, %s37
      %p41 = pneg %p35
      %p42 = scmp.eq.s32.totalorder %s26, 1
      %p43 = por %p41, %p42
      %p44 = scmp.ne.s32.totalorder %s36, %s39
      %p45 = scmp.eq.s32.totalorder %s26, 0
      %p46 = por %p44, %p45
      %p47 = scmp.ne.s32.totalorder %s36, %s39
      %p48 = scmp.eq.s32.totalorder %s31, 1
      %p49 = por %p47, %p48
      %p50 = scmp.ne.s32.totalorder %s39, %s40
      %p51 = scmp.eq.s32.totalorder %s31, 0
      %p52 = por %p50, %p51
      %p53 = scmp.ne.s32.totalorder %s39, %s40
      %p54 = scmp.eq.s32.totalorder %s32, 1
      %p55 = por %p53, %p54
      %p57 = scmp.ne.s32.totalorder %s40, %s56
      %p58 = scmp.eq.s32.totalorder %s32, 0
      %p59 = por %p57, %p58
      %s61 = sadd.s32 %s60, 1
      %p64 = scmp.eq.s32.totalorder %s26, 1
      %p65 = scmp.ne.s32.totalorder %s60, %s62
      %p66 = scmp.eq.s32.totalorder %s26, 0
      %p67 = por %p65, %p66
      %p68 = scmp.ne.s32.totalorder %s60, %s62
      %p69 = scmp.eq.s32.totalorder %s31, 1
      %p70 = por %p68, %p69
      %p71 = scmp.ne.s32.totalorder %s62, %s63
      %p72 = scmp.eq.s32.totalorder %s31, 0
      %p73 = por %p71, %p72
      %p74 = scmp.ne.s32.totalorder %s62, %s63
      %p75 = scmp.eq.s32.totalorder %s32, 1
      %p76 = por %p74, %p75
      %p78 = scmp.ne.s32.totalorder %s63, %s77
      %p79 = scmp.eq.s32.totalorder %s32, 0
      %p80 = por %p78, %p79
      %s82 = sadd.s32 %s81, 1
      %p85 = scmp.eq.s32.totalorder %s26, 1
      %p86 = scmp.ne.s32.totalorder %s81, %s83
      %p87 = scmp.eq.s32.totalorder %s26, 0
      %p88 = por %p86, %p87
      %p89 = scmp.ne.s32.totalorder %s81, %s83
      %p90 = scmp.eq.s32.totalorder %s31, 1
      %p91 = por %p89, %p90
      %p92 = scmp.ne.s32.totalorder %s83, %s84
      %p93 = scmp.eq.s32.totalorder %s31, 0
      %p94 = por %p92, %p93
      %p95 = scmp.ne.s32.totalorder %s83, %s84
      %p96 = scmp.eq.s32.totalorder %s32, 1
      %p97 = por %p95, %p96
      %p99 = scmp.ne.s32.totalorder %s84, %s98
      %p100 = scmp.eq.s32.totalorder %s32, 0
      %p101 = por %p99, %p100
      %s103 = sadd.s32 %s102, 1
      %p106 = scmp.eq.s32.totalorder %s26, 1
      %p107 = scmp.ne.s32.totalorder %s102, %s104
      %p108 = scmp.eq.s32.totalorder %s26, 0
      %p109 = por %p107, %p108
      %p110 = scmp.ne.s32.totalorder %s102, %s104
      %p111 = scmp.eq.s32.totalorder %s31, 1
      %p112 = por %p110, %p111
      %p113 = scmp.ne.s32.totalorder %s104, %s105
      %p114 = scmp.eq.s32.totalorder %s31, 0
      %p115 = por %p113, %p114
      %p116 = scmp.ne.s32.totalorder %s104, %s105
      %p117 = scmp.eq.s32.totalorder %s32, 1
      %p118 = por %p116, %p117
      %p120 = scmp.ne.s32.totalorder %s105, %s119
      %p121 = scmp.eq.s32.totalorder %s32, 0
      %p122 = por %p120, %p121
      %s124 = sadd.s32 %s123, 1
      %p127 = scmp.eq.s32.totalorder %s26, 1
      %p128 = scmp.ne.s32.totalorder %s123, %s125
      %p129 = scmp.eq.s32.totalorder %s26, 0
      %p130 = por %p128, %p129
      %p131 = scmp.ne.s32.totalorder %s123, %s125
      %p132 = scmp.eq.s32.totalorder %s31, 1
      %p133 = por %p131, %p132
      %p134 = scmp.ne.s32.totalorder %s125, %s126
      %p135 = scmp.eq.s32.totalorder %s31, 0
      %p136 = por %p134, %p135
      %p137 = scmp.ne.s32.totalorder %s125, %s126
      %p138 = scmp.eq.s32.totalorder %s32, 1
      %p139 = por %p137, %p138
      %p141 = scmp.ne.s32.totalorder %s126, %s140
      %p142 = scmp.eq.s32.totalorder %s32, 0
      %p143 = por %p141, %p142
      %s145 = sadd.s32 %s144, 1
      %p148 = scmp.eq.s32.totalorder %s26, 1
      %p149 = scmp.ne.s32.totalorder %s144, %s146
      %p150 = scmp.eq.s32.totalorder %s26, 0
      %p151 = por %p149, %p150
      %p152 = scmp.ne.s32.totalorder %s144, %s146
      %p153 = scmp.eq.s32.totalorder %s31, 1
      %p154 = por %p152, %p153
      %p155 = scmp.ne.s32.totalorder %s146, %s147
      %p156 = scmp.eq.s32.totalorder %s31, 0
      %p157 = por %p155, %p156
      %p158 = scmp.ne.s32.totalorder %s146, %s147
      %p159 = scmp.eq.s32.totalorder %s32, 1
      %p160 = por %p158, %p159
      %p162 = scmp.ne.s32.totalorder %s147, %s161
      %p163 = scmp.eq.s32.totalorder %s32, 0
      %p164 = por %p162, %p163
      %s166 = sadd.s32 %s165, 1
      %p169 = scmp.eq.s32.totalorder %s26, 1
      %p170 = scmp.ne.s32.totalorder %s165, %s167
      %p171 = scmp.eq.s32.totalorder %s26, 0
      %p172 = por %p170, %p171
      %p173 = scmp.ne.s32.totalorder %s165, %s167
      %p174 = scmp.eq.s32.totalorder %s31, 1
      %p175 = por %p173, %p174
      %p176 = scmp.ne.s32.totalorder %s167, %s168
      %p177 = scmp.eq.s32.totalorder %s31, 0
      %p178 = por %p176, %p177
      %p179 = scmp.ne.s32.totalorder %s167, %s168
      %p180 = scmp.eq.s32.totalorder %s32, 1
      %p181 = por %p179, %p180
      %p183 = scmp.ne.s32.totalorder %s168, %s182
      %p184 = scmp.eq.s32.totalorder %s32, 0
      %p185 = por %p183, %p184
      %s187 = sadd.s32 %s186, 1
      %p190 = scmp.eq.s32.totalorder %s26, 1
      %p191 = scmp.ne.s32.totalorder %s186, %s188
      %p192 = scmp.eq.s32.totalorder %s26, 0
      %p193 = por %p191, %p192
      %p194 = scmp.ne.s32.totalorder %s186, %s188
      %p195 = scmp.eq.s32.totalorder %s31, 1
      %p196 = por %p194, %p195
      %p197 = scmp.ne.s32.totalorder %s188, %s189
      %p198 = scmp.eq.s32.totalorder %s31, 0
      %p199 = por %p197, %p198
      %p200 = scmp.ne.s32.totalorder %s188, %s189
      %p201 = scmp.eq.s32.totalorder %s32, 1
      %p202 = por %p200, %p201
      %p204 = scmp.ne.s32.totalorder %s189, %s203
      %p205 = scmp.eq.s32.totalorder %s32, 0
      %p206 = por %p204, %p205
      %s208 = sadd.s32 %s207, 1
      %p211 = scmp.eq.s32.totalorder %s26, 1
      %p212 = scmp.ne.s32.totalorder %s207, %s209
      %p213 = scmp.eq.s32.totalorder %s26, 0
      %p214 = por %p212, %p213
      %p215 = scmp.ne.s32.totalorder %s207, %s209
      %p216 = scmp.eq.s32.totalorder %s31, 1
      %p217 = por %p215, %p216
      %p218 = scmp.ne.s32.totalorder %s209, %s210
      %p219 = scmp.eq.s32.totalorder %s31, 0
      %p220 = por %p218, %p219
      %p221 = scmp.ne.s32.totalorder %s209, %s210
      %p222 = scmp.eq.s32.totalorder %s32, 1
      %p223 = por %p221, %p222
      %p225 = scmp.ne.s32.totalorder %s210, %s224
      %p226 = scmp.eq.s32.totalorder %s32, 0
      %p227 = por %p225, %p226
      %s228 = ssub.s32 %s26, %s33
      %p229 = scmp.eq.s32.totalorder %s228, 0
      %s231 = sadd.s32 %s230, 1
      %s232 = scalar_select %p229, %s230, %s231
      %p235 = pneg %p229
      %p236 = scmp.eq.s32.totalorder %s26, 1
      %p237 = por %p235, %p236
      %p238 = scmp.ne.s32.totalorder %s230, %s233
      %p239 = scmp.eq.s32.totalorder %s26, 0
      %p240 = por %p238, %p239
      %p241 = scmp.ne.s32.totalorder %s230, %s233
      %p242 = scmp.eq.s32.totalorder %s31, 1
      %p243 = por %p241, %p242
      %p244 = scmp.ne.s32.totalorder %s233, %s234
      %p245 = scmp.eq.s32.totalorder %s31, 0
      %p246 = por %p244, %p245
      %p247 = scmp.ne.s32.totalorder %s233, %s234
      %p248 = scmp.eq.s32.totalorder %s32, 1
      %p249 = por %p247, %p248
      %p251 = scmp.ne.s32.totalorder %s234, %s250
      %p252 = scmp.eq.s32.totalorder %s32, 0
      %p253 = por %p251, %p252
      %p254 = scmp.le.s32.totalorder 1, %s26
      %p255 = scmp.lt.s32.totalorder %s26, 3
      %p256 = pnand %p254, %p255
      %p257 = pneg %p256
      // Predicated region
      $region9: #{tpu_custom_call.1} parent=5 // pred_check
        _
      $region10: #{tpu_custom_call.1} parent=5 // pred_check_branch
        %259 = sbr.rel (%p256) target = $region12
      $region11: #{tpu_custom_call.1} parent=5 // pred_region
        %s260 = ssub.s32 %s26, 1
        // Predicated region
        $region13: #{tpu_custom_call.1} parent=11 // pred_check
          %p261 = pneg %p73
        $region14: #{tpu_custom_call.1} parent=11 // pred_check_branch
          %263 = sbr.rel (%p261) target = $region16
        $region15: #{tpu_custom_call.1} parent=11 // pred_region
          %s265 = ssub.s32 256, 256
          %266 = vsyncadd [#allocation7], %s265
          %s268 = sshll.u32 [#allocation6], 4
          %s269 = int_to_ptr.vmem [resolvable:$true] %s268
          %271 = dma.hbm_to_vmem [thread:$0]  %s1, 256, %s269, [#allocation7]
        $region16: #{tpu_custom_call.1} parent=11 // pred_fallthru
          _
        // Predicated region
        $region17: #{tpu_custom_call.1} parent=11 // pred_check
          %p272 = pneg %p94
        $region18: #{tpu_custom_call.1} parent=11 // pred_check_branch
          %274 = sbr.rel (%p272) target = $region20
        $region19: #{tpu_custom_call.1} parent=11 // pred_region
          %s276 = ssub.s32 16, 16
          %277 = vsyncadd [#allocation5], %s276
          %s279 = sshll.u32 %s2, 4
          %s280 = int_to_ptr.vmem [resolvable:$true] %s279
          %282 = dma.vmem_to_smem %s280, 16, [#allocation8], [#allocation5]
        $region20: #{tpu_custom_call.1} parent=11 // pred_fallthru
          _
        // Predicated region
        $region21: #{tpu_custom_call.1} parent=11 // pred_check
          %p283 = pneg %p115
        $region22: #{tpu_custom_call.1} parent=11 // pred_check_branch
          %285 = sbr.rel (%p283) target = $region24
        $region23: #{tpu_custom_call.1} parent=11 // pred_region
          %s287 = ssub.s32 16, 16
          %288 = vsyncadd [#allocation10], %s287
          %s290 = sshll.u32 %s3, 4
          %s291 = int_to_ptr.vmem [resolvable:$true] %s290
          %293 = dma.vmem_to_smem %s291, 16, [#allocation9], [#allocation10]
        $region24: #{tpu_custom_call.1} parent=11 // pred_fallthru
          _
        // Predicated region
        $region25: #{tpu_custom_call.1} parent=11 // pred_check
          %p294 = pneg %p136
        $region26: #{tpu_custom_call.1} parent=11 // pred_check_branch
          %296 = sbr.rel (%p294) target = $region28
        $region27: #{tpu_custom_call.1} parent=11 // pred_region
          %s298 = ssub.s32 16, 16
          %299 = vsyncadd [#allocation10], %s298
          %s301 = sshll.u32 %s4, 4
          %s302 = int_to_ptr.vmem [resolvable:$true] %s301
          %304 = dma.vmem_to_smem %s302, 16, [#allocation11], [#allocation10]
        $region28: #{tpu_custom_call.1} parent=11 // pred_fallthru
          _
        // Predicated region
        $region29: #{tpu_custom_call.1} parent=11 // pred_check
          %p305 = pneg %p157
        $region30: #{tpu_custom_call.1} parent=11 // pred_check_branch
          %307 = sbr.rel (%p305) target = $region32
        $region31: #{tpu_custom_call.1} parent=11 // pred_region
          %s309 = ssub.s32 16, 16
          %310 = vsyncadd [#allocation13], %s309
          %s312 = sshll.u32 %s5, 4
          %s313 = int_to_ptr.vmem [resolvable:$true] %s312
          %315 = dma.vmem_to_smem %s313, 16, [#allocation12], [#allocation13]
        $region32: #{tpu_custom_call.1} parent=11 // pred_fallthru
          _
        // Predicated region
        $region33: #{tpu_custom_call.1} parent=11 // pred_check
          %p316 = pneg %p178
        $region34: #{tpu_custom_call.1} parent=11 // pred_check_branch
          %318 = sbr.rel (%p316) target = $region36
        $region35: #{tpu_custom_call.1} parent=11 // pred_region
          %s320 = ssub.s32 16, 16
          %321 = vsyncadd [#allocation13], %s320
          %s323 = sshll.u32 %s6, 4
          %s324 = int_to_ptr.vmem [resolvable:$true] %s323
          %326 = dma.vmem_to_smem %s324, 16, [#allocation14], [#allocation13]
        $region36: #{tpu_custom_call.1} parent=11 // pred_fallthru
          _
        // Predicated region
        $region37: #{tpu_custom_call.1} parent=11 // pred_check
          %p327 = pneg %p199
        $region38: #{tpu_custom_call.1} parent=11 // pred_check_branch
          %329 = sbr.rel (%p327) target = $region40
        $region39: #{tpu_custom_call.1} parent=11 // pred_region
          %s331 = ssub.s32 16, 16
          %332 = vsyncadd [#allocation16], %s331
          %s334 = sshll.u32 %s7, 4
          %s335 = int_to_ptr.vmem [resolvable:$true] %s334
          %337 = dma.vmem_to_smem %s335, 16, [#allocation15], [#allocation16]
        $region40: #{tpu_custom_call.1} parent=11 // pred_fallthru
          _
        // Predicated region
        $region41: #{tpu_custom_call.1} parent=11 // pred_check
          %p338 = pneg %p220
        $region42: #{tpu_custom_call.1} parent=11 // pred_check_branch
          %340 = sbr.rel (%p338) target = $region44
        $region43: #{tpu_custom_call.1} parent=11 // pred_region
          %s342 = ssub.s32 16, 16
          %343 = vsyncadd [#allocation16], %s342
          %s345 = sshll.u32 %s8, 4
          %s346 = int_to_ptr.vmem [resolvable:$true] %s345
          %348 = dma.vmem_to_smem %s346, 16, [#allocation17], [#allocation16]
        $region44: #{tpu_custom_call.1} parent=11 // pred_fallthru
          _
      $region12: #{tpu_custom_call.1} parent=5 // pred_fallthru
        _
      %p349 = scmp.lt.s32.totalorder %s26, 2
      // Predicated region
      $region45: #{tpu_custom_call.1} parent=5 // pred_check
        %p350 = pneg %p349
      $region46: #{tpu_custom_call.1} parent=5 // pred_check_branch
        %352 = sbr.rel (%p350) target = $region48
      $region47: #{tpu_custom_call.1} parent=5 // pred_region
        // Predicated region
        $region49: #{tpu_custom_call.1} parent=47 // pred_check
          %p353 = pneg %p46
        $region50: #{tpu_custom_call.1} parent=47 // pred_check_branch
          %355 = sbr.rel (%p353) target = $region52
        $region51: #{tpu_custom_call.1} parent=47 // pred_region
          %s356 = sand.u32 %s36, 1
          %s357 = scalar_lea.sflag [#allocation3], %s356
          %s358 = sand.u32 %s36, 1
          %s359 = smul.addr %s358, 64
          %s360 = scalar_lea.vmem [#allocation2], %s359
          %s362 = ssub.s32 1024, 1024
          %363 = vsyncadd %s357, %s362
          %s364 = smul.addr %s26, 2
          %s365 = smul.addr %s364, 128
          %s366 = scalar_lea.hbm %s0, %s365
          %s367 = sshll.u32 %s360, 4
          %s368 = int_to_ptr.vmem [resolvable:$true] %s367
          %373 = dma.hbm_to_vmem [thread:$0]  %s366, 1024, %s368, %s357, 512, 256, 16
        $region52: #{tpu_custom_call.1} parent=47 // pred_fallthru
          _
      $region48: #{tpu_custom_call.1} parent=5 // pred_fallthru
        _
      %p374 = scmp.le.s32.totalorder 1, %s26
      %p375 = scmp.lt.s32.totalorder %s26, 3
      %p376 = pnand %p374, %p375
      %p377 = pneg %p376
      // Predicated region
      $region53: #{tpu_custom_call.1} parent=5 // pred_check
        _
      $region54: #{tpu_custom_call.1} parent=5 // pred_check_branch
        %379 = sbr.rel (%p376) target = $region56
      $region55: #{tpu_custom_call.1} parent=5 // pred_region
        %s380 = ssub.s32 %s26, 1
        %s381 = sand.u32 %s39, 1
        %s382 = scalar_lea.sflag [#allocation3], %s381
        %s383 = sand.u32 %s39, 1
        %s384 = smul.addr %s383, 64
        %s385 = scalar_lea.vmem [#allocation2], %s384
        // Predicated region
        $region57: #{tpu_custom_call.1} parent=55 // pred_check
          %p386 = pneg %p52
        $region58: #{tpu_custom_call.1} parent=55 // pred_check_branch
          %388 = sbr.rel (%p386) target = $region60
        $region59: #{tpu_custom_call.1} parent=55 // pred_region
          %389 = dma.done %s382, 1024
        $region60: #{tpu_custom_call.1} parent=55 // pred_fallthru
          _
        // Predicated region
        $region61: #{tpu_custom_call.1} parent=55 // pred_check
          %p390 = pneg %p73
        $region62: #{tpu_custom_call.1} parent=55 // pred_check_branch
          %392 = sbr.rel (%p390) target = $region64
        $region63: #{tpu_custom_call.1} parent=55 // pred_region
          %393 = dma.done [#allocation7], 256
        $region64: #{tpu_custom_call.1} parent=55 // pred_fallthru
          _
        // Predicated region
        $region65: #{tpu_custom_call.1} parent=55 // pred_check
          %p394 = pneg %p94
        $region66: #{tpu_custom_call.1} parent=55 // pred_check_branch
          %396 = sbr.rel (%p394) target = $region68
        $region67: #{tpu_custom_call.1} parent=55 // pred_region
          %397 = dma.done [#allocation5], 16
        $region68: #{tpu_custom_call.1} parent=55 // pred_fallthru
          _
        // Predicated region
        $region69: #{tpu_custom_call.1} parent=55 // pred_check
          %p398 = pneg %p115
        $region70: #{tpu_custom_call.1} parent=55 // pred_check_branch
          %400 = sbr.rel (%p398) target = $region72
        $region71: #{tpu_custom_call.1} parent=55 // pred_region
          %401 = dma.done [#allocation10], 16
        $region72: #{tpu_custom_call.1} parent=55 // pred_fallthru
          _
        // Predicated region
        $region73: #{tpu_custom_call.1} parent=55 // pred_check
          %p402 = pneg %p136
        $region74: #{tpu_custom_call.1} parent=55 // pred_check_branch
          %404 = sbr.rel (%p402) target = $region76
        $region75: #{tpu_custom_call.1} parent=55 // pred_region
          %405 = dma.done [#allocation10], 16
        $region76: #{tpu_custom_call.1} parent=55 // pred_fallthru
          _
        // Predicated region
        $region77: #{tpu_custom_call.1} parent=55 // pred_check
          %p406 = pneg %p157
        $region78: #{tpu_custom_call.1} parent=55 // pred_check_branch
          %408 = sbr.rel (%p406) target = $region80
        $region79: #{tpu_custom_call.1} parent=55 // pred_region
          %409 = dma.done [#allocation13], 16
        $region80: #{tpu_custom_call.1} parent=55 // pred_fallthru
          _
        // Predicated region
        $region81: #{tpu_custom_call.1} parent=55 // pred_check
          %p410 = pneg %p178
        $region82: #{tpu_custom_call.1} parent=55 // pred_check_branch
          %412 = sbr.rel (%p410) target = $region84
        $region83: #{tpu_custom_call.1} parent=55 // pred_region
          %413 = dma.done [#allocation13], 16
        $region84: #{tpu_custom_call.1} parent=55 // pred_fallthru
          _
        // Predicated region
        $region85: #{tpu_custom_call.1} parent=55 // pred_check
          %p414 = pneg %p199
        $region86: #{tpu_custom_call.1} parent=55 // pred_check_branch
          %416 = sbr.rel (%p414) target = $region88
        $region87: #{tpu_custom_call.1} parent=55 // pred_region
          %417 = dma.done [#allocation16], 16
        $region88: #{tpu_custom_call.1} parent=55 // pred_fallthru
          _
        // Predicated region
        $region89: #{tpu_custom_call.1} parent=55 // pred_check
          %p418 = pneg %p220
        $region90: #{tpu_custom_call.1} parent=55 // pred_check_branch
          %420 = sbr.rel (%p418) target = $region92
        $region91: #{tpu_custom_call.1} parent=55 // pred_region
          %421 = dma.done [#allocation16], 16
        $region92: #{tpu_custom_call.1} parent=55 // pred_fallthru
          _
        %422 = sfence
        %s423 = sand.u32 %s39, 1
        %s424 = scalar_lea.sflag [#allocation3], %s423
        %s425 = sand.u32 %s39, 1
        %s426 = smul.addr %s425, 64
        %s427 = scalar_lea.vmem [#allocation2], %s426
        %p428 = pneg %p52
        %p429 = pneg %p49
        %p430 = pneg %p73
        %p431 = pneg %p70
        %p432 = pneg %p94
        %p433 = pneg %p91
        %p434 = pneg %p115
        %p435 = pneg %p112
        %p436 = pneg %p136
        %p437 = pneg %p133
        %p438 = pneg %p157
        %p439 = pneg %p154
        %p440 = pneg %p178
        %p441 = pneg %p175
        %p442 = pneg %p199
        %p443 = pneg %p196
        %p444 = pneg %p220
        %p445 = pneg %p217
        %p446 = pneg %p246
        %p447 = pneg %p243
        %s448 = sand.u32 %s233, 1
        %s449 = scalar_lea.sflag [#allocation4], %s448
        %s450 = sand.u32 %s233, 1
        %s451 = smul.addr %s450, 64
        %s452 = scalar_lea.vmem [#allocation18], %s451
        %v453 = vld [vmem:[#allocation6] ss:$8 sm:$0x3]
        %s454 = scalar_lea.vmem [#allocation6], 1
        %v455 = vld [vmem:[%s454] ss:$8 sm:$0x3]
        %s456 = scalar_lea.vmem [#allocation6], 2
        %v457 = vld [vmem:[%s456] ss:$8 sm:$0x3]
        %s458 = scalar_lea.vmem [#allocation6], 3
        %v459 = vld [vmem:[%s458] ss:$8 sm:$0x3]
        %s460 = scalar_lea.vmem [#allocation6], 4
        %v461 = vld [vmem:[%s460] ss:$8 sm:$0x3]
        %s462 = scalar_lea.vmem [#allocation6], 5
        %v463 = vld [vmem:[%s462] ss:$8 sm:$0x3]
        %s464 = scalar_lea.vmem [#allocation6], 6
        %v465 = vld [vmem:[%s464] ss:$8 sm:$0x3]
        %s466 = scalar_lea.vmem [#allocation6], 7
        %v467 = vld [vmem:[%s466] ss:$8 sm:$0x3]
        %v468 = vld [vmem:[%s385] sm:$0xff]
        %v469 = vld [vmem:[%s385 + $0x8] sm:$0xff]
        %s470 = scalar_lea.vmem %s385, 16 [#allocation2]
        %v471 = vld [vmem:[%s470] sm:$0xff]
        %v472 = vld [vmem:[%s470 + $0x8] sm:$0xff]
        %s473 = scalar_lea.vmem %s385, 32 [#allocation2]
        %v474 = vld [vmem:[%s473] sm:$0xff]
        %v475 = vld [vmem:[%s473 + $0x8] sm:$0xff]
        %s476 = scalar_lea.vmem %s385, 48 [#allocation2]
        %v477 = vld [vmem:[%s476] sm:$0xff]
        %v478 = vld [vmem:[%s476 + $0x8] sm:$0xff]
        %s479 = sld [smem:[#allocation8]]
        %v480 = vstv %s479
        %v481 = vmul.f32 %v480, %v468
        %v482 = vmul.f32 %v480, %v469
        %s483 = sld [smem:[#allocation8 + $0x1]]
        %v484 = vstv %s483
        %v485 = vmul.f32 %v484, %v471
        %v486 = vmul.f32 %v484, %v472
        %v487 = vadd.f32 %v481, %v485
        %v488 = vadd.f32 %v482, %v486
        %s489 = sld [smem:[#allocation8 + $0x2]]
        %v490 = vstv %s489
        %v491 = vmul.f32 %v490, %v474
        %v492 = vmul.f32 %v490, %v475
        %v493 = vadd.f32 %v487, %v491
        %v494 = vadd.f32 %v488, %v492
        %s495 = sld [smem:[#allocation8 + $0x3]]
        %v496 = vstv %s495
        %v497 = vmul.f32 %v496, %v477
        %v498 = vmul.f32 %v496, %v478
        %v499 = vadd.f32 %v493, %v497
        %v500 = vadd.f32 %v494, %v498
        %s501 = sld [smem:[#allocation8 + $0x4]]
        %v502 = vstv %s501
        %v503 = vmul.f32 %v502, %v468
        %v504 = vmul.f32 %v502, %v469
        %s505 = sld [smem:[#allocation8 + $0x5]]
        %v506 = vstv %s505
        %v507 = vmul.f32 %v506, %v471
        %v508 = vmul.f32 %v506, %v472
        %v509 = vadd.f32 %v503, %v507
        %v510 = vadd.f32 %v504, %v508
        %s511 = sld [smem:[#allocation8 + $0x6]]
        %v512 = vstv %s511
        %v513 = vmul.f32 %v512, %v474
        %v514 = vmul.f32 %v512, %v475
        %v515 = vadd.f32 %v509, %v513
        %v516 = vadd.f32 %v510, %v514
        %s517 = sld [smem:[#allocation8 + $0x7]]
        %v518 = vstv %s517
        %v519 = vmul.f32 %v518, %v477
        %v520 = vmul.f32 %v518, %v478
        %v521 = vadd.f32 %v515, %v519
        %v522 = vadd.f32 %v516, %v520
        %s523 = sld [smem:[#allocation8 + $0x8]]
        %v524 = vstv %s523
        %v525 = vmul.f32 %v524, %v468
        %v526 = vmul.f32 %v524, %v469
        %s527 = sld [smem:[#allocation8 + $0x9]]
        %v528 = vstv %s527
        %v529 = vmul.f32 %v528, %v471
        %v530 = vmul.f32 %v528, %v472
        %v531 = vadd.f32 %v525, %v529
        %v532 = vadd.f32 %v526, %v530
        %s533 = sld [smem:[#allocation8 + $0xa]]
        %v534 = vstv %s533
        %v535 = vmul.f32 %v534, %v474
        %v536 = vmul.f32 %v534, %v475
        %v537 = vadd.f32 %v531, %v535
        %v538 = vadd.f32 %v532, %v536
        %s539 = sld [smem:[#allocation8 + $0xb]]
        %v540 = vstv %s539
        %v541 = vmul.f32 %v540, %v477
        %v542 = vmul.f32 %v540, %v478
        %v543 = vadd.f32 %v537, %v541
        %v544 = vadd.f32 %v538, %v542
        %s545 = sld [smem:[#allocation8 + $0xc]]
        %v546 = vstv %s545
        %v547 = vmul.f32 %v546, %v468
        %v548 = vmul.f32 %v546, %v469
        %s549 = sld [smem:[#allocation8 + $0xd]]
        %v550 = vstv %s549
        %v551 = vmul.f32 %v550, %v471
        %v552 = vmul.f32 %v550, %v472
        %v553 = vadd.f32 %v547, %v551
        %v554 = vadd.f32 %v548, %v552
        %s555 = sld [smem:[#allocation8 + $0xe]]
        %v556 = vstv %s555
        %v557 = vmul.f32 %v556, %v474
        %v558 = vmul.f32 %v556, %v475
        %v559 = vadd.f32 %v553, %v557
        %v560 = vadd.f32 %v554, %v558
        %s561 = sld [smem:[#allocation8 + $0xf]]
        %v562 = vstv %s561
        %v563 = vmul.f32 %v562, %v477
        %v564 = vmul.f32 %v562, %v478
        %v565 = vadd.f32 %v559, %v563
        %v566 = vadd.f32 %v560, %v564
        %s567 = sld [smem:[#allocation11]]
        %v568 = vstv %s567
        %s569 = sld [smem:[#allocation11 + $0x1]]
        %v570 = vstv %s569
        %571 = vrot.lane.b32.xlu0 %v543, 17
        %v572 = vpop.permute.xlu0 %571
        %573 = vrot.lane.b32.xlu0 %v544, 17
        %v574 = vpop.permute.xlu0 %573
        %v575 = vlaneseq
        %v576 = vand.u32 %v575, 127
        %vm577 = vcmp.lt.s32.totalorder %v576, 17
        %v578 = vsel %vm577, %v572, %v574
        %v579 = vsel %vm577, %v574, %v572
        %v581 = vlaneseq
        %v582 = vshrl.u32 %v581, 7
        %v583 = vsub.s32 0, %v582
        %v584 = vrot.slane %v453, %v583
        %v585 = vlaneseq
        %v586 = vshrl.u32 %v585, 7
        %v587 = vsub.s32 1, %v586
        %v588 = vrot.slane %v453, %v587
        %v591 = vmul.f32 %v579, %v584
        %v592 = vmul.f32 %v578, %v588
        %s593 = sld [smem:[#allocation9]]
        %v594 = vstv %s593
        %v595 = vmul.f32 %v594, %v591
        %v596 = vmul.f32 %v594, %v592
        %v597 = vadd.f32 %v568, %v595
        %v598 = vadd.f32 %v568, %v596
        %s599 = sld [smem:[#allocation9 + $0x1]]
        %v600 = vstv %s599
        %v601 = vmul.f32 %v600, %v591
        %v602 = vmul.f32 %v600, %v592
        %v603 = vadd.f32 %v570, %v601
        %v604 = vadd.f32 %v570, %v602
        %605 = vrot.lane.b32.xlu0 %v565, 17
        %v606 = vpop.permute.xlu0 %605
        %607 = vrot.lane.b32.xlu0 %v566, 17
        %v608 = vpop.permute.xlu0 %607
        %v609 = vsel %vm577, %v606, %v608
        %v610 = vsel %vm577, %v608, %v606
        %v611 = vmul.f32 %v610, %v584
        %v612 = vmul.f32 %v609, %v588
        %s613 = sld [smem:[#allocation9 + $0x2]]
        %v614 = vstv %s613
        %v615 = vmul.f32 %v614, %v611
        %v616 = vmul.f32 %v614, %v612
        %v617 = vadd.f32 %v597, %v615
        %v618 = vadd.f32 %v598, %v616
        %s619 = sld [smem:[#allocation9 + $0x3]]
        %v620 = vstv %s619
        %v621 = vmul.f32 %v620, %v611
        %v622 = vmul.f32 %v620, %v612
        %v623 = vadd.f32 %v603, %v621
        %v624 = vadd.f32 %v604, %v622
        %625 = vrot.lane.b32.xlu0 %v543, 16
        %v626 = vpop.permute.xlu0 %625
        %627 = vrot.lane.b32.xlu0 %v544, 16
        %v628 = vpop.permute.xlu0 %627
        %vm629 = vcmp.lt.s32.totalorder %v576, 16
        %v630 = vsel %vm629, %v626, %v628
        %v631 = vsel %vm629, %v628, %v626
        %v633 = vlaneseq
        %v634 = vshrl.u32 %v633, 7
        %v635 = vsub.s32 0, %v634
        %v636 = vrot.slane %v455, %v635
        %v637 = vlaneseq
        %v638 = vshrl.u32 %v637, 7
        %v639 = vsub.s32 1, %v638
        %v640 = vrot.slane %v455, %v639
        %v643 = vmul.f32 %v631, %v636
        %v644 = vmul.f32 %v630, %v640
        %s645 = sld [smem:[#allocation9 + $0x4]]
        %v646 = vstv %s645
        %v647 = vmul.f32 %v646, %v643
        %v648 = vmul.f32 %v646, %v644
        %v649 = vadd.f32 %v617, %v647
        %v650 = vadd.f32 %v618, %v648
        %s651 = sld [smem:[#allocation9 + $0x5]]
        %v652 = vstv %s651
        %v653 = vmul.f32 %v652, %v643
        %v654 = vmul.f32 %v652, %v644
        %v655 = vadd.f32 %v623, %v653
        %v656 = vadd.f32 %v624, %v654
        %657 = vrot.lane.b32.xlu0 %v565, 16
        %v658 = vpop.permute.xlu0 %657
        %659 = vrot.lane.b32.xlu0 %v566, 16
        %v660 = vpop.permute.xlu0 %659
        %v661 = vsel %vm629, %v658, %v660
        %v662 = vsel %vm629, %v660, %v658
        %v663 = vmul.f32 %v662, %v636
        %v664 = vmul.f32 %v661, %v640
        %s665 = sld [smem:[#allocation9 + $0x6]]
        %v666 = vstv %s665
        %v667 = vmul.f32 %v666, %v663
        %v668 = vmul.f32 %v666, %v664
        %v669 = vadd.f32 %v649, %v667
        %v670 = vadd.f32 %v650, %v668
        %s671 = sld [smem:[#allocation9 + $0x7]]
        %v672 = vstv %s671
        %v673 = vmul.f32 %v672, %v663
        %v674 = vmul.f32 %v672, %v664
        %v675 = vadd.f32 %v655, %v673
        %v676 = vadd.f32 %v656, %v674
        %677 = vrot.lane.b32.xlu0 %v543, 15
        %v678 = vpop.permute.xlu0 %677
        %679 = vrot.lane.b32.xlu0 %v544, 15
        %v680 = vpop.permute.xlu0 %679
        %vm681 = vcmp.lt.s32.totalorder %v576, 15
        %v682 = vsel %vm681, %v678, %v680
        %v683 = vsel %vm681, %v680, %v678
        %v685 = vlaneseq
        %v686 = vshrl.u32 %v685, 7
        %v687 = vsub.s32 0, %v686
        %v688 = vrot.slane %v457, %v687
        %v689 = vlaneseq
        %v690 = vshrl.u32 %v689, 7
        %v691 = vsub.s32 1, %v690
        %v692 = vrot.slane %v457, %v691
        %v695 = vmul.f32 %v683, %v688
        %v696 = vmul.f32 %v682, %v692
        %s697 = sld [smem:[#allocation9 + $0x8]]
        %v698 = vstv %s697
        %v699 = vmul.f32 %v698, %v695
        %v700 = vmul.f32 %v698, %v696
        %v701 = vadd.f32 %v669, %v699
        %v702 = vadd.f32 %v670, %v700
        %s703 = sld [smem:[#allocation9 + $0x9]]
        %v704 = vstv %s703
        %v705 = vmul.f32 %v704, %v695
        %v706 = vmul.f32 %v704, %v696
        %v707 = vadd.f32 %v675, %v705
        %v708 = vadd.f32 %v676, %v706
        %709 = vrot.lane.b32.xlu0 %v565, 15
        %v710 = vpop.permute.xlu0 %709
        %711 = vrot.lane.b32.xlu0 %v566, 15
        %v712 = vpop.permute.xlu0 %711
        %v713 = vsel %vm681, %v710, %v712
        %v714 = vsel %vm681, %v712, %v710
        %v715 = vmul.f32 %v714, %v688
        %v716 = vmul.f32 %v713, %v692
        %s717 = sld [smem:[#allocation9 + $0xa]]
        %v718 = vstv %s717
        %v719 = vmul.f32 %v718, %v715
        %v720 = vmul.f32 %v718, %v716
        %v721 = vadd.f32 %v701, %v719
        %v722 = vadd.f32 %v702, %v720
        %s723 = sld [smem:[#allocation9 + $0xb]]
        %v724 = vstv %s723
        %v725 = vmul.f32 %v724, %v715
        %v726 = vmul.f32 %v724, %v716
        %v727 = vadd.f32 %v707, %v725
        %v728 = vadd.f32 %v708, %v726
        %729 = vrot.lane.b32.xlu0 %v543, 1
        %v730 = vpop.permute.xlu0 %729
        %731 = vrot.lane.b32.xlu0 %v544, 1
        %v732 = vpop.permute.xlu0 %731
        %vm733 = vcmp.lt.s32.totalorder %v576, 1
        %v734 = vsel %vm733, %v730, %v732
        %v735 = vsel %vm733, %v732, %v730
        %v737 = vlaneseq
        %v738 = vshrl.u32 %v737, 7
        %v739 = vsub.s32 0, %v738
        %v740 = vrot.slane %v459, %v739
        %v741 = vlaneseq
        %v742 = vshrl.u32 %v741, 7
        %v743 = vsub.s32 1, %v742
        %v744 = vrot.slane %v459, %v743
        %v747 = vmul.f32 %v735, %v740
        %v748 = vmul.f32 %v734, %v744
        %s749 = sld [smem:[#allocation9 + $0xc]]
        %v750 = vstv %s749
        %v751 = vmul.f32 %v750, %v747
        %v752 = vmul.f32 %v750, %v748
        %v753 = vadd.f32 %v721, %v751
        %v754 = vadd.f32 %v722, %v752
        %s755 = sld [smem:[#allocation9 + $0xd]]
        %v756 = vstv %s755
        %v757 = vmul.f32 %v756, %v747
        %v758 = vmul.f32 %v756, %v748
        %v759 = vadd.f32 %v727, %v757
        %v760 = vadd.f32 %v728, %v758
        %761 = vrot.lane.b32.xlu0 %v565, 1
        %v762 = vpop.permute.xlu0 %761
        %763 = vrot.lane.b32.xlu0 %v566, 1
        %v764 = vpop.permute.xlu0 %763
        %v765 = vsel %vm733, %v762, %v764
        %v766 = vsel %vm733, %v764, %v762
        %v767 = vmul.f32 %v766, %v740
        %v768 = vmul.f32 %v765, %v744
        %s769 = sld [smem:[#allocation9 + $0xe]]
        %v770 = vstv %s769
        %v771 = vmul.f32 %v770, %v767
        %v772 = vmul.f32 %v770, %v768
        %v773 = vadd.f32 %v753, %v771
        %v774 = vadd.f32 %v754, %v772
        %s775 = sld [smem:[#allocation9 + $0xf]]
        %v776 = vstv %s775
        %v777 = vmul.f32 %v776, %v767
        %v778 = vmul.f32 %v776, %v768
        %v779 = vadd.f32 %v759, %v777
        %v780 = vadd.f32 %v760, %v778
        %s781 = sld [smem:[#allocation9 + $0x10]]
        %v782 = vstv %s781
        %v783 = vmul.f32 %v782, %v543
        %v784 = vmul.f32 %v782, %v544
        %v785 = vadd.f32 %v773, %v783
        %v786 = vadd.f32 %v774, %v784
        %s787 = sld [smem:[#allocation9 + $0x11]]
        %v788 = vstv %s787
        %v789 = vmul.f32 %v788, %v543
        %v790 = vmul.f32 %v788, %v544
        %v791 = vadd.f32 %v779, %v789
        %v792 = vadd.f32 %v780, %v790
        %s793 = sld [smem:[#allocation9 + $0x12]]
        %v794 = vstv %s793
        %v795 = vmul.f32 %v794, %v565
        %v796 = vmul.f32 %v794, %v566
        %v797 = vadd.f32 %v785, %v795
        %v798 = vadd.f32 %v786, %v796
        %s799 = sld [smem:[#allocation9 + $0x13]]
        %v800 = vstv %s799
        %v801 = vmul.f32 %v800, %v565
        %v802 = vmul.f32 %v800, %v566
        %v803 = vadd.f32 %v791, %v801
        %v804 = vadd.f32 %v792, %v802
        %805 = vrot.lane.b32.xlu0 %v543, 127
        %v806 = vpop.permute.xlu0 %805
        %807 = vrot.lane.b32.xlu0 %v544, 127
        %v808 = vpop.permute.xlu0 %807
        %vm809 = vcmp.lt.s32.totalorder %v576, 127
        %v810 = vsel %vm809, %v806, %v808
        %v811 = vsel %vm809, %v808, %v806
        %v813 = vlaneseq
        %v814 = vshrl.u32 %v813, 7
        %v815 = vsub.s32 0, %v814
        %v816 = vrot.slane %v461, %v815
        %v817 = vlaneseq
        %v818 = vshrl.u32 %v817, 7
        %v819 = vsub.s32 1, %v818
        %v820 = vrot.slane %v461, %v819
        %v823 = vmul.f32 %v810, %v816
        %v824 = vmul.f32 %v811, %v820
        %s825 = sld [smem:[#allocation9 + $0x14]]
        %v826 = vstv %s825
        %v827 = vmul.f32 %v826, %v823
        %v828 = vmul.f32 %v826, %v824
        %v829 = vadd.f32 %v797, %v827
        %v830 = vadd.f32 %v798, %v828
        %s831 = sld [smem:[#allocation9 + $0x15]]
        %v832 = vstv %s831
        %v833 = vmul.f32 %v832, %v823
        %v834 = vmul.f32 %v832, %v824
        %v835 = vadd.f32 %v803, %v833
        %v836 = vadd.f32 %v804, %v834
        %837 = vrot.lane.b32.xlu0 %v565, 127
        %v838 = vpop.permute.xlu0 %837
        %839 = vrot.lane.b32.xlu0 %v566, 127
        %v840 = vpop.permute.xlu0 %839
        %v841 = vsel %vm809, %v838, %v840
        %v842 = vsel %vm809, %v840, %v838
        %v843 = vmul.f32 %v841, %v816
        %v844 = vmul.f32 %v842, %v820
        %s845 = sld [smem:[#allocation9 + $0x16]]
        %v846 = vstv %s845
        %v847 = vmul.f32 %v846, %v843
        %v848 = vmul.f32 %v846, %v844
        %v849 = vadd.f32 %v829, %v847
        %v850 = vadd.f32 %v830, %v848
        %s851 = sld [smem:[#allocation9 + $0x17]]
        %v852 = vstv %s851
        %v853 = vmul.f32 %v852, %v843
        %v854 = vmul.f32 %v852, %v844
        %v855 = vadd.f32 %v835, %v853
        %v856 = vadd.f32 %v836, %v854
        %857 = vrot.lane.b32.xlu0 %v543, 113
        %v858 = vpop.permute.xlu0 %857
        %859 = vrot.lane.b32.xlu0 %v544, 113
        %v860 = vpop.permute.xlu0 %859
        %vm861 = vcmp.lt.s32.totalorder %v576, 113
        %v862 = vsel %vm861, %v858, %v860
        %v863 = vsel %vm861, %v860, %v858
        %v865 = vlaneseq
        %v866 = vshrl.u32 %v865, 7
        %v867 = vsub.s32 0, %v866
        %v868 = vrot.slane %v463, %v867
        %v869 = vlaneseq
        %v870 = vshrl.u32 %v869, 7
        %v871 = vsub.s32 1, %v870
        %v872 = vrot.slane %v463, %v871
        %v875 = vmul.f32 %v862, %v868
        %v876 = vmul.f32 %v863, %v872
        %s877 = sld [smem:[#allocation9 + $0x18]]
        %v878 = vstv %s877
        %v879 = vmul.f32 %v878, %v875
        %v880 = vmul.f32 %v878, %v876
        %v881 = vadd.f32 %v849, %v879
        %v882 = vadd.f32 %v850, %v880
        %s883 = sld [smem:[#allocation9 + $0x19]]
        %v884 = vstv %s883
        %v885 = vmul.f32 %v884, %v875
        %v886 = vmul.f32 %v884, %v876
        %v887 = vadd.f32 %v855, %v885
        %v888 = vadd.f32 %v856, %v886
        %889 = vrot.lane.b32.xlu0 %v565, 113
        %v890 = vpop.permute.xlu0 %889
        %891 = vrot.lane.b32.xlu0 %v566, 113
        %v892 = vpop.permute.xlu0 %891
        %v893 = vsel %vm861, %v890, %v892
        %v894 = vsel %vm861, %v892, %v890
        %v895 = vmul.f32 %v893, %v868
        %v896 = vmul.f32 %v894, %v872
        %s897 = sld [smem:[#allocation9 + $0x1a]]
        %v898 = vstv %s897
        %v899 = vmul.f32 %v898, %v895
        %v900 = vmul.f32 %v898, %v896
        %v901 = vadd.f32 %v881, %v899
        %v902 = vadd.f32 %v882, %v900
        %s903 = sld [smem:[#allocation9 + $0x1b]]
        %v904 = vstv %s903
        %v905 = vmul.f32 %v904, %v895
        %v906 = vmul.f32 %v904, %v896
        %v907 = vadd.f32 %v887, %v905
        %v908 = vadd.f32 %v888, %v906
        %909 = vrot.lane.b32.xlu0 %v543, 112
        %v910 = vpop.permute.xlu0 %909
        %911 = vrot.lane.b32.xlu0 %v544, 112
        %v912 = vpop.permute.xlu0 %911
        %vm913 = vcmp.lt.s32.totalorder %v576, 112
        %v914 = vsel %vm913, %v910, %v912
        %v915 = vsel %vm913, %v912, %v910
        %v917 = vlaneseq
        %v918 = vshrl.u32 %v917, 7
        %v919 = vsub.s32 0, %v918
        %v920 = vrot.slane %v465, %v919
        %v921 = vlaneseq
        %v922 = vshrl.u32 %v921, 7
        %v923 = vsub.s32 1, %v922
        %v924 = vrot.slane %v465, %v923
        %v927 = vmul.f32 %v914, %v920
        %v928 = vmul.f32 %v915, %v924
        %s929 = sld [smem:[#allocation9 + $0x1c]]
        %v930 = vstv %s929
        %v931 = vmul.f32 %v930, %v927
        %v932 = vmul.f32 %v930, %v928
        %v933 = vadd.f32 %v901, %v931
        %v934 = vadd.f32 %v902, %v932
        %s935 = sld [smem:[#allocation9 + $0x1d]]
        %v936 = vstv %s935
        %v937 = vmul.f32 %v936, %v927
        %v938 = vmul.f32 %v936, %v928
        %v939 = vadd.f32 %v907, %v937
        %v940 = vadd.f32 %v908, %v938
        %941 = vrot.lane.b32.xlu0 %v565, 112
        %v942 = vpop.permute.xlu0 %941
        %943 = vrot.lane.b32.xlu0 %v566, 112
        %v944 = vpop.permute.xlu0 %943
        %v945 = vsel %vm913, %v942, %v944
        %v946 = vsel %vm913, %v944, %v942
        %v947 = vmul.f32 %v945, %v920
        %v948 = vmul.f32 %v946, %v924
        %s949 = sld [smem:[#allocation9 + $0x1e]]
        %v950 = vstv %s949
        %v951 = vmul.f32 %v950, %v947
        %v952 = vmul.f32 %v950, %v948
        %v953 = vadd.f32 %v933, %v951
        %v954 = vadd.f32 %v934, %v952
        %s955 = sld [smem:[#allocation9 + $0x1f]]
        %v956 = vstv %s955
        %v957 = vmul.f32 %v956, %v947
        %v958 = vmul.f32 %v956, %v948
        %v959 = vadd.f32 %v939, %v957
        %v960 = vadd.f32 %v940, %v958
        %961 = vrot.lane.b32.xlu0 %v543, 111
        %v962 = vpop.permute.xlu0 %961
        %963 = vrot.lane.b32.xlu0 %v544, 111
        %v964 = vpop.permute.xlu0 %963
        %vm965 = vcmp.lt.s32.totalorder %v576, 111
        %v966 = vsel %vm965, %v962, %v964
        %v967 = vsel %vm965, %v964, %v962
        %v969 = vlaneseq
        %v970 = vshrl.u32 %v969, 7
        %v971 = vsub.s32 0, %v970
        %v972 = vrot.slane %v467, %v971
        %v973 = vlaneseq
        %v974 = vshrl.u32 %v973, 7
        %v975 = vsub.s32 1, %v974
        %v976 = vrot.slane %v467, %v975
        %v979 = vmul.f32 %v966, %v972
        %v980 = vmul.f32 %v967, %v976
        %s981 = sld [smem:[#allocation9 + $0x20]]
        %v982 = vstv %s981
        %v983 = vmul.f32 %v982, %v979
        %v984 = vmul.f32 %v982, %v980
        %v985 = vadd.f32 %v953, %v983
        %v986 = vadd.f32 %v954, %v984
        %s987 = sld [smem:[#allocation9 + $0x21]]
        %v988 = vstv %s987
        %v989 = vmul.f32 %v988, %v979
        %v990 = vmul.f32 %v988, %v980
        %v991 = vadd.f32 %v959, %v989
        %v992 = vadd.f32 %v960, %v990
        %993 = vrot.lane.b32.xlu0 %v565, 111
        %v994 = vpop.permute.xlu0 %993
        %995 = vrot.lane.b32.xlu0 %v566, 111
        %v996 = vpop.permute.xlu0 %995
        %v997 = vsel %vm965, %v994, %v996
        %v998 = vsel %vm965, %v996, %v994
        %v999 = vmul.f32 %v997, %v972
        %v1000 = vmul.f32 %v998, %v976
        %s1001 = sld [smem:[#allocation9 + $0x22]]
        %v1002 = vstv %s1001
        %v1003 = vmul.f32 %v1002, %v999
        %v1004 = vmul.f32 %v1002, %v1000
        %v1005 = vadd.f32 %v985, %v1003
        %v1006 = vadd.f32 %v986, %v1004
        %s1007 = sld [smem:[#allocation9 + $0x23]]
        %v1008 = vstv %s1007
        %v1009 = vmul.f32 %v1008, %v999
        %v1010 = vmul.f32 %v1008, %v1000
        %v1011 = vadd.f32 %v991, %v1009
        %v1012 = vadd.f32 %v992, %v1010
        %v1013 = vadd.f32 %v499, %v1005
        %v1014 = vadd.f32 %v500, %v1006
        %v1015 = vadd.f32 %v521, %v1011
        %v1016 = vadd.f32 %v522, %v1012
        %s1017 = sld [smem:[#allocation17]]
        %v1018 = vstv %s1017
        %s1019 = sld [smem:[#allocation17 + $0x1]]
        %v1020 = vstv %s1019
        %s1021 = sld [smem:[#allocation14]]
        %v1022 = vstv %s1021
        %s1023 = sld [smem:[#allocation14 + $0x1]]
        %v1024 = vstv %s1023
        %1025 = vrot.lane.b32.xlu0 %v1013, 17
        %v1026 = vpop.permute.xlu0 %1025
        %1027 = vrot.lane.b32.xlu0 %v1014, 17
        %v1028 = vpop.permute.xlu0 %1027
        %v1029 = vsel %vm577, %v1026, %v1028
        %v1030 = vsel %vm577, %v1028, %v1026
        %v1031 = vmul.f32 %v1030, %v584
        %v1032 = vmul.f32 %v1029, %v588
        %s1033 = sld [smem:[#allocation15]]
        %v1034 = vstv %s1033
        %v1035 = vmul.f32 %v1034, %v1031
        %v1036 = vmul.f32 %v1034, %v1032
        %v1037 = vadd.f32 %v1018, %v1035
        %v1038 = vadd.f32 %v1018, %v1036
        %s1039 = sld [smem:[#allocation15 + $0x1]]
        %v1040 = vstv %s1039
        %v1041 = vmul.f32 %v1040, %v1031
        %v1042 = vmul.f32 %v1040, %v1032
        %v1043 = vadd.f32 %v1020, %v1041
        %v1044 = vadd.f32 %v1020, %v1042
        %s1045 = sld [smem:[#allocation12]]
        %v1046 = vstv %s1045
        %v1047 = vmul.f32 %v1046, %v1031
        %v1048 = vmul.f32 %v1046, %v1032
        %v1049 = vadd.f32 %v1022, %v1047
        %v1050 = vadd.f32 %v1022, %v1048
        %s1051 = sld [smem:[#allocation12 + $0x1]]
        %v1052 = vstv %s1051
        %v1053 = vmul.f32 %v1052, %v1031
        %v1054 = vmul.f32 %v1052, %v1032
        %v1055 = vadd.f32 %v1024, %v1053
        %v1056 = vadd.f32 %v1024, %v1054
        %1057 = vrot.lane.b32.xlu0 %v1015, 17
        %v1058 = vpop.permute.xlu0 %1057
        %1059 = vrot.lane.b32.xlu0 %v1016, 17
        %v1060 = vpop.permute.xlu0 %1059
        %v1061 = vsel %vm577, %v1058, %v1060
        %v1062 = vsel %vm577, %v1060, %v1058
        %v1063 = vmul.f32 %v1062, %v584
        %v1064 = vmul.f32 %v1061, %v588
        %s1065 = sld [smem:[#allocation15 + $0x2]]
        %v1066 = vstv %s1065
        %v1067 = vmul.f32 %v1066, %v1063
        %v1068 = vmul.f32 %v1066, %v1064
        %v1069 = vadd.f32 %v1037, %v1067
        %v1070 = vadd.f32 %v1038, %v1068
        %s1071 = sld [smem:[#allocation15 + $0x3]]
        %v1072 = vstv %s1071
        %v1073 = vmul.f32 %v1072, %v1063
        %v1074 = vmul.f32 %v1072, %v1064
        %v1075 = vadd.f32 %v1043, %v1073
        %v1076 = vadd.f32 %v1044, %v1074
        %s1077 = sld [smem:[#allocation12 + $0x2]]
        %v1078 = vstv %s1077
        %v1079 = vmul.f32 %v1078, %v1063
        %v1080 = vmul.f32 %v1078, %v1064
        %v1081 = vadd.f32 %v1049, %v1079
        %v1082 = vadd.f32 %v1050, %v1080
        %s1083 = sld [smem:[#allocation12 + $0x3]]
        %v1084 = vstv %s1083
        %v1085 = vmul.f32 %v1084, %v1063
        %v1086 = vmul.f32 %v1084, %v1064
        %v1087 = vadd.f32 %v1055, %v1085
        %v1088 = vadd.f32 %v1056, %v1086
        %1089 = vrot.lane.b32.xlu0 %v1013, 16
        %v1090 = vpop.permute.xlu0 %1089
        %1091 = vrot.lane.b32.xlu0 %v1014, 16
        %v1092 = vpop.permute.xlu0 %1091
        %v1093 = vsel %vm629, %v1090, %v1092
        %v1094 = vsel %vm629, %v1092, %v1090
        %v1095 = vmul.f32 %v1094, %v636
        %v1096 = vmul.f32 %v1093, %v640
        %s1097 = sld [smem:[#allocation15 + $0x4]]
        %v1098 = vstv %s1097
        %v1099 = vmul.f32 %v1098, %v1095
        %v1100 = vmul.f32 %v1098, %v1096
        %v1101 = vadd.f32 %v1069, %v1099
        %v1102 = vadd.f32 %v1070, %v1100
        %s1103 = sld [smem:[#allocation15 + $0x5]]
        %v1104 = vstv %s1103
        %v1105 = vmul.f32 %v1104, %v1095
        %v1106 = vmul.f32 %v1104, %v1096
        %v1107 = vadd.f32 %v1075, %v1105
        %v1108 = vadd.f32 %v1076, %v1106
        %s1109 = sld [smem:[#allocation12 + $0x4]]
        %v1110 = vstv %s1109
        %v1111 = vmul.f32 %v1110, %v1095
        %v1112 = vmul.f32 %v1110, %v1096
        %v1113 = vadd.f32 %v1081, %v1111
        %v1114 = vadd.f32 %v1082, %v1112
        %s1115 = sld [smem:[#allocation12 + $0x5]]
        %v1116 = vstv %s1115
        %v1117 = vmul.f32 %v1116, %v1095
        %v1118 = vmul.f32 %v1116, %v1096
        %v1119 = vadd.f32 %v1087, %v1117
        %v1120 = vadd.f32 %v1088, %v1118
        %1121 = vrot.lane.b32.xlu0 %v1015, 16
        %v1122 = vpop.permute.xlu0 %1121
        %1123 = vrot.lane.b32.xlu0 %v1016, 16
        %v1124 = vpop.permute.xlu0 %1123
        %v1125 = vsel %vm629, %v1122, %v1124
        %v1126 = vsel %vm629, %v1124, %v1122
        %v1127 = vmul.f32 %v1126, %v636
        %v1128 = vmul.f32 %v1125, %v640
        %s1129 = sld [smem:[#allocation15 + $0x6]]
        %v1130 = vstv %s1129
        %v1131 = vmul.f32 %v1130, %v1127
        %v1132 = vmul.f32 %v1130, %v1128
        %v1133 = vadd.f32 %v1101, %v1131
        %v1134 = vadd.f32 %v1102, %v1132
        %s1135 = sld [smem:[#allocation15 + $0x7]]
        %v1136 = vstv %s1135
        %v1137 = vmul.f32 %v1136, %v1127
        %v1138 = vmul.f32 %v1136, %v1128
        %v1139 = vadd.f32 %v1107, %v1137
        %v1140 = vadd.f32 %v1108, %v1138
        %s1141 = sld [smem:[#allocation12 + $0x6]]
        %v1142 = vstv %s1141
        %v1143 = vmul.f32 %v1142, %v1127
        %v1144 = vmul.f32 %v1142, %v1128
        %v1145 = vadd.f32 %v1113, %v1143
        %v1146 = vadd.f32 %v1114, %v1144
        %s1147 = sld [smem:[#allocation12 + $0x7]]
        %v1148 = vstv %s1147
        %v1149 = vmul.f32 %v1148, %v1127
        %v1150 = vmul.f32 %v1148, %v1128
        %v1151 = vadd.f32 %v1119, %v1149
        %v1152 = vadd.f32 %v1120, %v1150
        %1153 = vrot.lane.b32.xlu0 %v1013, 15
        %v1154 = vpop.permute.xlu0 %1153
        %1155 = vrot.lane.b32.xlu0 %v1014, 15
        %v1156 = vpop.permute.xlu0 %1155
        %v1157 = vsel %vm681, %v1154, %v1156
        %v1158 = vsel %vm681, %v1156, %v1154
        %v1159 = vmul.f32 %v1158, %v688
        %v1160 = vmul.f32 %v1157, %v692
        %s1161 = sld [smem:[#allocation15 + $0x8]]
        %v1162 = vstv %s1161
        %v1163 = vmul.f32 %v1162, %v1159
        %v1164 = vmul.f32 %v1162, %v1160
        %v1165 = vadd.f32 %v1133, %v1163
        %v1166 = vadd.f32 %v1134, %v1164
        %s1167 = sld [smem:[#allocation15 + $0x9]]
        %v1168 = vstv %s1167
        %v1169 = vmul.f32 %v1168, %v1159
        %v1170 = vmul.f32 %v1168, %v1160
        %v1171 = vadd.f32 %v1139, %v1169
        %v1172 = vadd.f32 %v1140, %v1170
        %s1173 = sld [smem:[#allocation12 + $0x8]]
        %v1174 = vstv %s1173
        %v1175 = vmul.f32 %v1174, %v1159
        %v1176 = vmul.f32 %v1174, %v1160
        %v1177 = vadd.f32 %v1145, %v1175
        %v1178 = vadd.f32 %v1146, %v1176
        %s1179 = sld [smem:[#allocation12 + $0x9]]
        %v1180 = vstv %s1179
        %v1181 = vmul.f32 %v1180, %v1159
        %v1182 = vmul.f32 %v1180, %v1160
        %v1183 = vadd.f32 %v1151, %v1181
        %v1184 = vadd.f32 %v1152, %v1182
        %1185 = vrot.lane.b32.xlu0 %v1015, 15
        %v1186 = vpop.permute.xlu0 %1185
        %1187 = vrot.lane.b32.xlu0 %v1016, 15
        %v1188 = vpop.permute.xlu0 %1187
        %v1189 = vsel %vm681, %v1186, %v1188
        %v1190 = vsel %vm681, %v1188, %v1186
        %v1191 = vmul.f32 %v1190, %v688
        %v1192 = vmul.f32 %v1189, %v692
        %s1193 = sld [smem:[#allocation15 + $0xa]]
        %v1194 = vstv %s1193
        %v1195 = vmul.f32 %v1194, %v1191
        %v1196 = vmul.f32 %v1194, %v1192
        %v1197 = vadd.f32 %v1165, %v1195
        %v1198 = vadd.f32 %v1166, %v1196
        %s1199 = sld [smem:[#allocation15 + $0xb]]
        %v1200 = vstv %s1199
        %v1201 = vmul.f32 %v1200, %v1191
        %v1202 = vmul.f32 %v1200, %v1192
        %v1203 = vadd.f32 %v1171, %v1201
        %v1204 = vadd.f32 %v1172, %v1202
        %s1205 = sld [smem:[#allocation12 + $0xa]]
        %v1206 = vstv %s1205
        %v1207 = vmul.f32 %v1206, %v1191
        %v1208 = vmul.f32 %v1206, %v1192
        %v1209 = vadd.f32 %v1177, %v1207
        %v1210 = vadd.f32 %v1178, %v1208
        %s1211 = sld [smem:[#allocation12 + $0xb]]
        %v1212 = vstv %s1211
        %v1213 = vmul.f32 %v1212, %v1191
        %v1214 = vmul.f32 %v1212, %v1192
        %v1215 = vadd.f32 %v1183, %v1213
        %v1216 = vadd.f32 %v1184, %v1214
        %1217 = vrot.lane.b32.xlu0 %v1013, 1
        %v1218 = vpop.permute.xlu0 %1217
        %1219 = vrot.lane.b32.xlu0 %v1014, 1
        %v1220 = vpop.permute.xlu0 %1219
        %v1221 = vsel %vm733, %v1218, %v1220
        %v1222 = vsel %vm733, %v1220, %v1218
        %v1223 = vmul.f32 %v1222, %v740
        %v1224 = vmul.f32 %v1221, %v744
        %s1225 = sld [smem:[#allocation15 + $0xc]]
        %v1226 = vstv %s1225
        %v1227 = vmul.f32 %v1226, %v1223
        %v1228 = vmul.f32 %v1226, %v1224
        %v1229 = vadd.f32 %v1197, %v1227
        %v1230 = vadd.f32 %v1198, %v1228
        %s1231 = sld [smem:[#allocation15 + $0xd]]
        %v1232 = vstv %s1231
        %v1233 = vmul.f32 %v1232, %v1223
        %v1234 = vmul.f32 %v1232, %v1224
        %v1235 = vadd.f32 %v1203, %v1233
        %v1236 = vadd.f32 %v1204, %v1234
        %s1237 = sld [smem:[#allocation12 + $0xc]]
        %v1238 = vstv %s1237
        %v1239 = vmul.f32 %v1238, %v1223
        %v1240 = vmul.f32 %v1238, %v1224
        %v1241 = vadd.f32 %v1209, %v1239
        %v1242 = vadd.f32 %v1210, %v1240
        %s1243 = sld [smem:[#allocation12 + $0xd]]
        %v1244 = vstv %s1243
        %v1245 = vmul.f32 %v1244, %v1223
        %v1246 = vmul.f32 %v1244, %v1224
        %v1247 = vadd.f32 %v1215, %v1245
        %v1248 = vadd.f32 %v1216, %v1246
        %1249 = vrot.lane.b32.xlu0 %v1015, 1
        %v1250 = vpop.permute.xlu0 %1249
        %1251 = vrot.lane.b32.xlu0 %v1016, 1
        %v1252 = vpop.permute.xlu0 %1251
        %v1253 = vsel %vm733, %v1250, %v1252
        %v1254 = vsel %vm733, %v1252, %v1250
        %v1255 = vmul.f32 %v1254, %v740
        %v1256 = vmul.f32 %v1253, %v744
        %s1257 = sld [smem:[#allocation15 + $0xe]]
        %v1258 = vstv %s1257
        %v1259 = vmul.f32 %v1258, %v1255
        %v1260 = vmul.f32 %v1258, %v1256
        %v1261 = vadd.f32 %v1229, %v1259
        %v1262 = vadd.f32 %v1230, %v1260
        %s1263 = sld [smem:[#allocation15 + $0xf]]
        %v1264 = vstv %s1263
        %v1265 = vmul.f32 %v1264, %v1255
        %v1266 = vmul.f32 %v1264, %v1256
        %v1267 = vadd.f32 %v1235, %v1265
        %v1268 = vadd.f32 %v1236, %v1266
        %s1269 = sld [smem:[#allocation12 + $0xe]]
        %v1270 = vstv %s1269
        %v1271 = vmul.f32 %v1270, %v1255
        %v1272 = vmul.f32 %v1270, %v1256
        %v1273 = vadd.f32 %v1241, %v1271
        %v1274 = vadd.f32 %v1242, %v1272
        %s1275 = sld [smem:[#allocation12 + $0xf]]
        %v1276 = vstv %s1275
        %v1277 = vmul.f32 %v1276, %v1255
        %v1278 = vmul.f32 %v1276, %v1256
        %v1279 = vadd.f32 %v1247, %v1277
        %v1280 = vadd.f32 %v1248, %v1278
        %s1281 = sld [smem:[#allocation15 + $0x10]]
        %v1282 = vstv %s1281
        %v1283 = vmul.f32 %v1282, %v1013
        %v1284 = vmul.f32 %v1282, %v1014
        %v1285 = vadd.f32 %v1261, %v1283
        %v1286 = vadd.f32 %v1262, %v1284
        %s1287 = sld [smem:[#allocation15 + $0x11]]
        %v1288 = vstv %s1287
        %v1289 = vmul.f32 %v1288, %v1013
        %v1290 = vmul.f32 %v1288, %v1014
        %v1291 = vadd.f32 %v1267, %v1289
        %v1292 = vadd.f32 %v1268, %v1290
        %s1293 = sld [smem:[#allocation12 + $0x10]]
        %v1294 = vstv %s1293
        %v1295 = vmul.f32 %v1294, %v1013
        %v1296 = vmul.f32 %v1294, %v1014
        %v1297 = vadd.f32 %v1273, %v1295
        %v1298 = vadd.f32 %v1274, %v1296
        %s1299 = sld [smem:[#allocation12 + $0x11]]
        %v1300 = vstv %s1299
        %v1301 = vmul.f32 %v1300, %v1013
        %v1302 = vmul.f32 %v1300, %v1014
        %v1303 = vadd.f32 %v1279, %v1301
        %v1304 = vadd.f32 %v1280, %v1302
        %s1305 = sld [smem:[#allocation15 + $0x12]]
        %v1306 = vstv %s1305
        %v1307 = vmul.f32 %v1306, %v1015
        %v1308 = vmul.f32 %v1306, %v1016
        %v1309 = vadd.f32 %v1285, %v1307
        %v1310 = vadd.f32 %v1286, %v1308
        %s1311 = sld [smem:[#allocation15 + $0x13]]
        %v1312 = vstv %s1311
        %v1313 = vmul.f32 %v1312, %v1015
        %v1314 = vmul.f32 %v1312, %v1016
        %v1315 = vadd.f32 %v1291, %v1313
        %v1316 = vadd.f32 %v1292, %v1314
        %s1317 = sld [smem:[#allocation12 + $0x12]]
        %v1318 = vstv %s1317
        %v1319 = vmul.f32 %v1318, %v1015
        %v1320 = vmul.f32 %v1318, %v1016
        %v1321 = vadd.f32 %v1297, %v1319
        %v1322 = vadd.f32 %v1298, %v1320
        %s1323 = sld [smem:[#allocation12 + $0x13]]
        %v1324 = vstv %s1323
        %v1325 = vmul.f32 %v1324, %v1015
        %v1326 = vmul.f32 %v1324, %v1016
        %v1327 = vadd.f32 %v1303, %v1325
        %v1328 = vadd.f32 %v1304, %v1326
        %1329 = vrot.lane.b32.xlu0 %v1013, 127
        %v1330 = vpop.permute.xlu0 %1329
        %1331 = vrot.lane.b32.xlu0 %v1014, 127
        %v1332 = vpop.permute.xlu0 %1331
        %v1333 = vsel %vm809, %v1330, %v1332
        %v1334 = vsel %vm809, %v1332, %v1330
        %v1335 = vmul.f32 %v1333, %v816
        %v1336 = vmul.f32 %v1334, %v820
        %s1337 = sld [smem:[#allocation15 + $0x14]]
        %v1338 = vstv %s1337
        %v1339 = vmul.f32 %v1338, %v1335
        %v1340 = vmul.f32 %v1338, %v1336
        %v1341 = vadd.f32 %v1309, %v1339
        %v1342 = vadd.f32 %v1310, %v1340
        %s1343 = sld [smem:[#allocation15 + $0x15]]
        %v1344 = vstv %s1343
        %v1345 = vmul.f32 %v1344, %v1335
        %v1346 = vmul.f32 %v1344, %v1336
        %v1347 = vadd.f32 %v1315, %v1345
        %v1348 = vadd.f32 %v1316, %v1346
        %s1349 = sld [smem:[#allocation12 + $0x14]]
        %v1350 = vstv %s1349
        %v1351 = vmul.f32 %v1350, %v1335
        %v1352 = vmul.f32 %v1350, %v1336
        %v1353 = vadd.f32 %v1321, %v1351
        %v1354 = vadd.f32 %v1322, %v1352
        %s1355 = sld [smem:[#allocation12 + $0x15]]
        %v1356 = vstv %s1355
        %v1357 = vmul.f32 %v1356, %v1335
        %v1358 = vmul.f32 %v1356, %v1336
        %v1359 = vadd.f32 %v1327, %v1357
        %v1360 = vadd.f32 %v1328, %v1358
        %1361 = vrot.lane.b32.xlu0 %v1015, 127
        %v1362 = vpop.permute.xlu0 %1361
        %1363 = vrot.lane.b32.xlu0 %v1016, 127
        %v1364 = vpop.permute.xlu0 %1363
        %v1365 = vsel %vm809, %v1362, %v1364
        %v1366 = vsel %vm809, %v1364, %v1362
        %v1367 = vmul.f32 %v1365, %v816
        %v1368 = vmul.f32 %v1366, %v820
        %s1369 = sld [smem:[#allocation15 + $0x16]]
        %v1370 = vstv %s1369
        %v1371 = vmul.f32 %v1370, %v1367
        %v1372 = vmul.f32 %v1370, %v1368
        %v1373 = vadd.f32 %v1341, %v1371
        %v1374 = vadd.f32 %v1342, %v1372
        %s1375 = sld [smem:[#allocation15 + $0x17]]
        %v1376 = vstv %s1375
        %v1377 = vmul.f32 %v1376, %v1367
        %v1378 = vmul.f32 %v1376, %v1368
        %v1379 = vadd.f32 %v1347, %v1377
        %v1380 = vadd.f32 %v1348, %v1378
        %s1381 = sld [smem:[#allocation12 + $0x16]]
        %v1382 = vstv %s1381
        %v1383 = vmul.f32 %v1382, %v1367
        %v1384 = vmul.f32 %v1382, %v1368
        %v1385 = vadd.f32 %v1353, %v1383
        %v1386 = vadd.f32 %v1354, %v1384
        %s1387 = sld [smem:[#allocation12 + $0x17]]
        %v1388 = vstv %s1387
        %v1389 = vmul.f32 %v1388, %v1367
        %v1390 = vmul.f32 %v1388, %v1368
        %v1391 = vadd.f32 %v1359, %v1389
        %v1392 = vadd.f32 %v1360, %v1390
        %1393 = vrot.lane.b32.xlu0 %v1013, 113
        %v1394 = vpop.permute.xlu0 %1393
        %1395 = vrot.lane.b32.xlu0 %v1014, 113
        %v1396 = vpop.permute.xlu0 %1395
        %v1397 = vsel %vm861, %v1394, %v1396
        %v1398 = vsel %vm861, %v1396, %v1394
        %v1399 = vmul.f32 %v1397, %v868
        %v1400 = vmul.f32 %v1398, %v872
        %s1401 = sld [smem:[#allocation15 + $0x18]]
        %v1402 = vstv %s1401
        %v1403 = vmul.f32 %v1402, %v1399
        %v1404 = vmul.f32 %v1402, %v1400
        %v1405 = vadd.f32 %v1373, %v1403
        %v1406 = vadd.f32 %v1374, %v1404
        %s1407 = sld [smem:[#allocation15 + $0x19]]
        %v1408 = vstv %s1407
        %v1409 = vmul.f32 %v1408, %v1399
        %v1410 = vmul.f32 %v1408, %v1400
        %v1411 = vadd.f32 %v1379, %v1409
        %v1412 = vadd.f32 %v1380, %v1410
        %s1413 = sld [smem:[#allocation12 + $0x18]]
        %v1414 = vstv %s1413
        %v1415 = vmul.f32 %v1414, %v1399
        %v1416 = vmul.f32 %v1414, %v1400
        %v1417 = vadd.f32 %v1385, %v1415
        %v1418 = vadd.f32 %v1386, %v1416
        %s1419 = sld [smem:[#allocation12 + $0x19]]
        %v1420 = vstv %s1419
        %v1421 = vmul.f32 %v1420, %v1399
        %v1422 = vmul.f32 %v1420, %v1400
        %v1423 = vadd.f32 %v1391, %v1421
        %v1424 = vadd.f32 %v1392, %v1422
        %1425 = vrot.lane.b32.xlu0 %v1015, 113
        %v1426 = vpop.permute.xlu0 %1425
        %1427 = vrot.lane.b32.xlu0 %v1016, 113
        %v1428 = vpop.permute.xlu0 %1427
        %v1429 = vsel %vm861, %v1426, %v1428
        %v1430 = vsel %vm861, %v1428, %v1426
        %v1431 = vmul.f32 %v1429, %v868
        %v1432 = vmul.f32 %v1430, %v872
        %s1433 = sld [smem:[#allocation15 + $0x1a]]
        %v1434 = vstv %s1433
        %v1435 = vmul.f32 %v1434, %v1431
        %v1436 = vmul.f32 %v1434, %v1432
        %v1437 = vadd.f32 %v1405, %v1435
        %v1438 = vadd.f32 %v1406, %v1436
        %s1439 = sld [smem:[#allocation15 + $0x1b]]
        %v1440 = vstv %s1439
        %v1441 = vmul.f32 %v1440, %v1431
        %v1442 = vmul.f32 %v1440, %v1432
        %v1443 = vadd.f32 %v1411, %v1441
        %v1444 = vadd.f32 %v1412, %v1442
        %s1445 = sld [smem:[#allocation12 + $0x1a]]
        %v1446 = vstv %s1445
        %v1447 = vmul.f32 %v1446, %v1431
        %v1448 = vmul.f32 %v1446, %v1432
        %v1449 = vadd.f32 %v1417, %v1447
        %v1450 = vadd.f32 %v1418, %v1448
        %s1451 = sld [smem:[#allocation12 + $0x1b]]
        %v1452 = vstv %s1451
        %v1453 = vmul.f32 %v1452, %v1431
        %v1454 = vmul.f32 %v1452, %v1432
        %v1455 = vadd.f32 %v1423, %v1453
        %v1456 = vadd.f32 %v1424, %v1454
        %1457 = vrot.lane.b32.xlu0 %v1013, 112
        %v1458 = vpop.permute.xlu0 %1457
        %1459 = vrot.lane.b32.xlu0 %v1014, 112
        %v1460 = vpop.permute.xlu0 %1459
        %v1461 = vsel %vm913, %v1458, %v1460
        %v1462 = vsel %vm913, %v1460, %v1458
        %v1463 = vmul.f32 %v1461, %v920
        %v1464 = vmul.f32 %v1462, %v924
        %s1465 = sld [smem:[#allocation15 + $0x1c]]
        %v1466 = vstv %s1465
        %v1467 = vmul.f32 %v1466, %v1463
        %v1468 = vmul.f32 %v1466, %v1464
        %v1469 = vadd.f32 %v1437, %v1467
        %v1470 = vadd.f32 %v1438, %v1468
        %s1471 = sld [smem:[#allocation15 + $0x1d]]
        %v1472 = vstv %s1471
        %v1473 = vmul.f32 %v1472, %v1463
        %v1474 = vmul.f32 %v1472, %v1464
        %v1475 = vadd.f32 %v1443, %v1473
        %v1476 = vadd.f32 %v1444, %v1474
        %s1477 = sld [smem:[#allocation12 + $0x1c]]
        %v1478 = vstv %s1477
        %v1479 = vmul.f32 %v1478, %v1463
        %v1480 = vmul.f32 %v1478, %v1464
        %v1481 = vadd.f32 %v1449, %v1479
        %v1482 = vadd.f32 %v1450, %v1480
        %s1483 = sld [smem:[#allocation12 + $0x1d]]
        %v1484 = vstv %s1483
        %v1485 = vmul.f32 %v1484, %v1463
        %v1486 = vmul.f32 %v1484, %v1464
        %v1487 = vadd.f32 %v1455, %v1485
        %v1488 = vadd.f32 %v1456, %v1486
        %1489 = vrot.lane.b32.xlu0 %v1015, 112
        %v1490 = vpop.permute.xlu0 %1489
        %1491 = vrot.lane.b32.xlu0 %v1016, 112
        %v1492 = vpop.permute.xlu0 %1491
        %v1493 = vsel %vm913, %v1490, %v1492
        %v1494 = vsel %vm913, %v1492, %v1490
        %v1495 = vmul.f32 %v1493, %v920
        %v1496 = vmul.f32 %v1494, %v924
        %s1497 = sld [smem:[#allocation15 + $0x1e]]
        %v1498 = vstv %s1497
        %v1499 = vmul.f32 %v1498, %v1495
        %v1500 = vmul.f32 %v1498, %v1496
        %v1501 = vadd.f32 %v1469, %v1499
        %v1502 = vadd.f32 %v1470, %v1500
        %s1503 = sld [smem:[#allocation15 + $0x1f]]
        %v1504 = vstv %s1503
        %v1505 = vmul.f32 %v1504, %v1495
        %v1506 = vmul.f32 %v1504, %v1496
        %v1507 = vadd.f32 %v1475, %v1505
        %v1508 = vadd.f32 %v1476, %v1506
        %s1509 = sld [smem:[#allocation12 + $0x1e]]
        %v1510 = vstv %s1509
        %v1511 = vmul.f32 %v1510, %v1495
        %v1512 = vmul.f32 %v1510, %v1496
        %v1513 = vadd.f32 %v1481, %v1511
        %v1514 = vadd.f32 %v1482, %v1512
        %s1515 = sld [smem:[#allocation12 + $0x1f]]
        %v1516 = vstv %s1515
        %v1517 = vmul.f32 %v1516, %v1495
        %v1518 = vmul.f32 %v1516, %v1496
        %v1519 = vadd.f32 %v1487, %v1517
        %v1520 = vadd.f32 %v1488, %v1518
        %1521 = vrot.lane.b32.xlu0 %v1013, 111
        %v1522 = vpop.permute.xlu0 %1521
        %1523 = vrot.lane.b32.xlu0 %v1014, 111
        %v1524 = vpop.permute.xlu0 %1523
        %v1525 = vsel %vm965, %v1522, %v1524
        %v1526 = vsel %vm965, %v1524, %v1522
        %v1527 = vmul.f32 %v1525, %v972
        %v1528 = vmul.f32 %v1526, %v976
        %s1529 = sld [smem:[#allocation15 + $0x20]]
        %v1530 = vstv %s1529
        %v1531 = vmul.f32 %v1530, %v1527
        %v1532 = vmul.f32 %v1530, %v1528
        %v1533 = vadd.f32 %v1501, %v1531
        %v1534 = vadd.f32 %v1502, %v1532
        %s1535 = sld [smem:[#allocation15 + $0x21]]
        %v1536 = vstv %s1535
        %v1537 = vmul.f32 %v1536, %v1527
        %v1538 = vmul.f32 %v1536, %v1528
        %v1539 = vadd.f32 %v1507, %v1537
        %v1540 = vadd.f32 %v1508, %v1538
        %s1541 = sld [smem:[#allocation12 + $0x20]]
        %v1542 = vstv %s1541
        %v1543 = vmul.f32 %v1542, %v1527
        %v1544 = vmul.f32 %v1542, %v1528
        %v1545 = vadd.f32 %v1513, %v1543
        %v1546 = vadd.f32 %v1514, %v1544
        %s1547 = sld [smem:[#allocation12 + $0x21]]
        %v1548 = vstv %s1547
        %v1549 = vmul.f32 %v1548, %v1527
        %v1550 = vmul.f32 %v1548, %v1528
        %v1551 = vadd.f32 %v1519, %v1549
        %v1552 = vadd.f32 %v1520, %v1550
        %1553 = vrot.lane.b32.xlu0 %v1015, 111
        %v1554 = vpop.permute.xlu0 %1553
        %1555 = vrot.lane.b32.xlu0 %v1016, 111
        %v1556 = vpop.permute.xlu0 %1555
        %v1557 = vsel %vm965, %v1554, %v1556
        %v1558 = vsel %vm965, %v1556, %v1554
        %v1559 = vmul.f32 %v1557, %v972
        %v1560 = vmul.f32 %v1558, %v976
        %s1561 = sld [smem:[#allocation15 + $0x22]]
        %v1562 = vstv %s1561
        %v1563 = vmul.f32 %v1562, %v1559
        %v1564 = vmul.f32 %v1562, %v1560
        %v1565 = vadd.f32 %v1533, %v1563
        %v1566 = vadd.f32 %v1534, %v1564
        %s1567 = sld [smem:[#allocation15 + $0x23]]
        %v1568 = vstv %s1567
        %v1569 = vmul.f32 %v1568, %v1559
        %v1570 = vmul.f32 %v1568, %v1560
        %v1571 = vadd.f32 %v1539, %v1569
        %v1572 = vadd.f32 %v1540, %v1570
        %s1573 = sld [smem:[#allocation12 + $0x22]]
        %v1574 = vstv %s1573
        %v1575 = vmul.f32 %v1574, %v1559
        %v1576 = vmul.f32 %v1574, %v1560
        %v1577 = vadd.f32 %v1545, %v1575
        %v1578 = vadd.f32 %v1546, %v1576
        %s1579 = sld [smem:[#allocation12 + $0x23]]
        %v1580 = vstv %s1579
        %v1581 = vmul.f32 %v1580, %v1559
        %v1582 = vmul.f32 %v1580, %v1560
        %v1583 = vadd.f32 %v1551, %v1581
        %v1584 = vadd.f32 %v1552, %v1582
        %v1585 = vtanh.pop %v1565
        %v1586 = vtanh.pop %v1566
        %v1587 = vmul.f32 %v1585, 0.8
        %v1588 = vmul.f32 %v1586, 0.8
        %v1589 = vmul.f32 %v1587, 1.442695
        %v1590 = vpow.pop %v1589
        %v1591 = vmul.f32 %v1588, 1.442695
        %v1592 = vpow.pop %v1591
        %v1593 = vmul.f32 %v543, %v1590
        %v1594 = vmul.f32 %v544, %v1592
        %v1595 = vadd.f32 %v1593, %v1577
        %v1596 = vadd.f32 %v1594, %v1578
        %v1597 = vtanh.pop %v1571
        %v1598 = vtanh.pop %v1572
        %v1599 = vmul.f32 %v1597, 0.8
        %v1600 = vmul.f32 %v1598, 0.8
        %v1601 = vmul.f32 %v1599, 1.442695
        %v1602 = vpow.pop %v1601
        %v1603 = vmul.f32 %v1600, 1.442695
        %v1604 = vpow.pop %v1603
        %v1605 = vmul.f32 %v565, %v1602
        %v1606 = vmul.f32 %v566, %v1604
        %v1607 = vadd.f32 %v1605, %v1583
        %v1608 = vadd.f32 %v1606, %v1584
        %1609 = vst [vmem:[%s452] sm:$0xff] %v1013
        %1610 = vst [vmem:[%s452 + $0x8] sm:$0xff] %v1014
        %s1611 = scalar_lea.vmem %s452, 16 [#allocation18]
        %1612 = vst [vmem:[%s1611] sm:$0xff] %v1015
        %1613 = vst [vmem:[%s1611 + $0x8] sm:$0xff] %v1016
        %s1614 = scalar_lea.vmem %s452, 32 [#allocation18]
        %1615 = vst [vmem:[%s1614] sm:$0xff] %v1595
        %1616 = vst [vmem:[%s1614 + $0x8] sm:$0xff] %v1596
        %s1617 = scalar_lea.vmem %s452, 48 [#allocation18]
        %1618 = vst [vmem:[%s1617] sm:$0xff] %v1607
        %1619 = vst [vmem:[%s1617 + $0x8] sm:$0xff] %v1608
        %s1620 = sand.u32 %s233, 1
        %s1621 = scalar_lea.sflag [#allocation4], %s1620
        %s1622 = sand.u32 %s233, 1
        %s1623 = smul.addr %s1622, 64
        %s1624 = scalar_lea.vmem [#allocation18], %s1623
        // Predicated region
        $region93: #{tpu_custom_call.1} parent=55 // pred_check
          %p1625 = pneg %p243
        $region94: #{tpu_custom_call.1} parent=55 // pred_check_branch
          %1627 = sbr.rel (%p1625) target = $region96
        $region95: #{tpu_custom_call.1} parent=55 // pred_region
          %s1629 = ssub.s32 1024, 1024
          %1630 = vsyncadd %s1621, %s1629
          %s1631 = smul.addr %s31, 2
          %s1632 = smul.addr %s1631, 128
          %s1633 = scalar_lea.hbm %s9, %s1632
          %s1634 = sshll.u32 %s1624, 4
          %s1635 = int_to_ptr.vmem [resolvable:$true] %s1634
          %1640 = dma.vmem_to_hbm [thread:$0]  %s1635, 1024, %s1633, %s1621, 256, 512, 16
        $region96: #{tpu_custom_call.1} parent=55 // pred_fallthru
          _
      $region56: #{tpu_custom_call.1} parent=5 // pred_fallthru
        _
      %p1641 = scmp.le.s32.totalorder 2, %s26
      // Predicated region
      $region97: #{tpu_custom_call.1} parent=5 // pred_check
        %p1642 = pneg %p1641
      $region98: #{tpu_custom_call.1} parent=5 // pred_check_branch
        %1644 = sbr.rel (%p1642) target = $region100
      $region99: #{tpu_custom_call.1} parent=5 // pred_region
        %s1645 = ssub.s32 %s26, 2
        // Predicated region
        $region101: #{tpu_custom_call.1} parent=99 // pred_check
          %p1646 = pneg %p249
        $region102: #{tpu_custom_call.1} parent=99 // pred_check_branch
          %1648 = sbr.rel (%p1646) target = $region104
        $region103: #{tpu_custom_call.1} parent=99 // pred_region
          %s1649 = sand.u32 %s234, 1
          %s1650 = scalar_lea.sflag [#allocation4], %s1649
          %s1651 = sand.u32 %s234, 1
          %s1652 = smul.addr %s1651, 64
          %s1653 = scalar_lea.vmem [#allocation18], %s1652
          %1654 = dma.done %s1650, 1024
        $region104: #{tpu_custom_call.1} parent=99 // pred_fallthru
          _
      $region100: #{tpu_custom_call.1} parent=5 // pred_fallthru
        _
    $region6: #{tpu_custom_call.1} parent=1 // loop_footer
      %s30 = sadd.s32 1, %s26
    $region7: #{tpu_custom_call.1} parent=1 // loop_footer_branch
      %25 = sbr.rel target = $region3
    $region8: #{tpu_custom_call.1} parent=1 // loop_exit
      _
    %1655 = vsyncpa [#allocation3], 1
    %s1656 = scalar_lea.sflag [#allocation3], 1
    %1657 = vsyncpa %s1656, 1
    %1658 = vsyncpa [#allocation7], 1
    %1659 = vsyncpa [#allocation4], 1
    %s1660 = scalar_lea.sflag [#allocation4], 1
    %1661 = vsyncpa %s1660, 1
    %1662 = vsyncpa [#allocation5], 1
    %s1663 = scalar_lea.sflag [#allocation5], 1
    %1664 = vsyncpa %s1663, 1
    %1665 = vsyncpa [#allocation10], 1
    %1666 = vsyncpa [#allocation13], 1
    %1667 = vsyncpa [#allocation16], 1

</llo_original>
